<compile_context>
chip_gen: v5e
topology: v5e:2x2
jax: 0.10.0
libtpu: 0.0.40
codegen_flags: <defaults>
</compile_context>

<pallas_src>
import functools

import jax
import jax.numpy as jnp
from jax.experimental import pallas as pl
from jax.experimental.pallas import tpu as pltpu


# ----------------------------------------------------------------------------
# In-kernel helpers
# ----------------------------------------------------------------------------

def _ln(x, g, b, eps=1e-12):
    mu = jnp.mean(x, axis=-1, keepdims=True)
    var = jnp.mean((x - mu) ** 2, axis=-1, keepdims=True)
    return (x - mu) * jax.lax.rsqrt(var + eps) * g + b


def _encode(dims, emb_ref, mask_ref, wqkv_ref, wo_ref, w1_ref, w2_ref,
            cls_w_ref, vec_ref):
    """Encoder stack + classifier for ONE sequence (the current grid step).

    Returns logits [S, V]; they never touch HBM."""
    S, H, F, nH, L, V = dims
    dh = H // nH
    scale = 1.0 / float(dh) ** 0.5
    bf16 = jnp.bfloat16

    def vrow(i, w):                       # packed bias/LN vector bank row
        return vec_ref[i:i + 1, 0:w]      # lane slice from 0 -> no relayout

    h = _ln(emb_ref[...], vrow(0, H), vrow(1, H))      # [S, H] f32
    mrow = mask_ref[0]                                  # [1, S] additive mask

    for l in range(L):                                  # static unroll (L=2)
        base = 2 + 8 * l
        wqkv_l = wqkv_ref[l]                            # [H, 3H] bf16
        wo_l = wo_ref[l]                                # [H, H]  bf16

        # Fused QKV projection: one MXU pass, N = 3H lanes.
        qkv = jnp.dot(h.astype(bf16), wqkv_l,
                      preferred_element_type=jnp.float32) + vrow(base + 0, 3 * H)

        # Per-head attention; head merge folded into the output projection:
        #   attn = sum_h (softmax(q_h k_h^T) v_h) @ Wo[h*dh:(h+1)*dh, :]
        attn = None
        for hh in range(nH):
            q_h = qkv[:, hh * dh:(hh + 1) * dh]                     # [S, dh]
            k_h = qkv[:, H + hh * dh:H + (hh + 1) * dh]             # [S, dh]
            v_h = qkv[:, 2 * H + hh * dh:2 * H + (hh + 1) * dh]     # [S, dh]

            # q_h @ k_h^T without materializing a transpose.
            s = jax.lax.dot_general(q_h.astype(bf16), k_h.astype(bf16),
                                    (((1,), (1,)), ((), ())),
                                    preferred_element_type=jnp.float32)
            s = s * scale + mrow
            s = s - jnp.max(s, axis=-1, keepdims=True)
            e = jnp.exp(s)
            p = e / jnp.sum(e, axis=-1, keepdims=True)              # exact div

            ctx_h = jnp.dot(p.astype(bf16), v_h.astype(bf16),
                            preferred_element_type=jnp.float32)     # [S, dh]
            part = jnp.dot(ctx_h.astype(bf16), wo_l[hh * dh:(hh + 1) * dh, :],
                           preferred_element_type=jnp.float32)      # [S, H]
            attn = part if attn is None else attn + part

        attn = attn + vrow(base + 1, H)
        h1 = _ln(attn + h, vrow(base + 2, H), vrow(base + 3, H))    # residual

        ff = jnp.dot(h1.astype(bf16), w1_ref[l],
                     preferred_element_type=jnp.float32) + vrow(base + 4, F)
        # TODO(synk): PyTorch BERT uses exact-erf GELU; tanh approximation kept
        # here for Mosaic-safe lowering (tiny numeric difference per layer).
        ff = jax.nn.gelu(ff, approximate=True)
        ff = jnp.dot(ff.astype(bf16), w2_ref[l],
                     preferred_element_type=jnp.float32) + vrow(base + 5, H)
        h = _ln(ff + h1, vrow(base + 6, H), vrow(base + 7, H))      # residual

    logits = jnp.dot(h.astype(bf16), cls_w_ref[...],
                     preferred_element_type=jnp.float32) + vrow(2 + 8 * L, V)
    return logits                                                   # [S, V]


# ----------------------------------------------------------------------------
# Fused whole-model kernels
# ----------------------------------------------------------------------------

def _bert_infer_kernel(dims, emb_ref, mask_ref, wqkv_ref, wo_ref, w1_ref,
                       w2_ref, cls_w_ref, vec_ref, probs_ref):
    logits = _encode(dims, emb_ref, mask_ref, wqkv_ref, wo_ref, w1_ref,
                     w2_ref, cls_w_ref, vec_ref)
    z = logits - jnp.max(logits, axis=-1, keepdims=True)
    e = jnp.exp(z)
    probs_ref[...] = e / jnp.sum(e, axis=-1, keepdims=True)


def _bert_loss_kernel(dims, emb_ref, mask_ref, labels_ref, wqkv_ref, wo_ref,
                      w1_ref, w2_ref, cls_w_ref, vec_ref, loss_ref,
                      tot_ref, cnt_ref):
    b = pl.program_id(0)

    @pl.when(b == 0)
    def _():
        tot_ref[...] = jnp.zeros_like(tot_ref)
        cnt_ref[...] = jnp.zeros_like(cnt_ref)

    logits = _encode(dims, emb_ref, mask_ref, wqkv_ref, wo_ref, w1_ref,
                     w2_ref, cls_w_ref, vec_ref)                    # [S, V]
    labels = labels_ref[...]                                        # [S, 1] i32

    m = jnp.max(logits, axis=-1, keepdims=True)
    shifted = logits - m
    lse = jnp.log(jnp.sum(jnp.exp(shifted), axis=-1, keepdims=True))
    logp = shifted - lse                                            # log-softmax
    iota = jax.lax.broadcasted_iota(jnp.int32, logits.shape, 1)
    onehot = (iota == labels).astype(jnp.float32)
    nll = -jnp.sum(onehot * logp, axis=-1, keepdims=True)           # [S, 1]
    valid = (labels != 0).astype(jnp.float32)                       # ignore_index=0

    tot_ref[...] += jnp.sum(nll * valid, keepdims=True)
    cnt_ref[...] += jnp.sum(valid, keepdims=True)

    @pl.when(b == pl.num_programs(0) - 1)
    def _():
        # TODO(synk): PyTorch returns NaN when every label is ignored; we clamp
        # the count to 1 and return 0 instead.
        loss_ref[...] = tot_ref[...] / jnp.maximum(cnt_ref[...], 1.0)


# ----------------------------------------------------------------------------
# Wrappers
# ----------------------------------------------------------------------------

def _const_spec(shape):
    n = len(shape)
    return pl.BlockSpec(shape, lambda b, n=n: (0,) * n)


def _pack_vec_bank(params):
    """Pack all small bias / LayerNorm vectors into one [NV, width] f32 slab."""
    L = params["wqkv"].shape[0]
    rows = [params["emb_ln_g"], params["emb_ln_b"]]
    for l in range(L):
        rows += [params["bqkv"][l], params["bo"][l],
                 params["ln1_g"][l], params["ln1_b"][l],
                 params["b1"][l], params["b2"][l],
                 params["ln2_g"][l], params["ln2_b"][l]]
    rows.append(params["cls_b"])
    width = max(int(r.size) for r in rows)
    width = ((width + 127) // 128) * 128
    padded = [jnp.pad(r.reshape(-1).astype(jnp.float32),
                      (0, width - int(r.size))) for r in rows]
    return jnp.stack(padded, axis=0)


def torch_model_forward(params, x, y=None, mask=None):
    """Mirrors TorchModel.forward: CE loss if y is given, else softmax probs."""
    B, S = x.shape
    H = params["word_emb"].shape[1]
    V = params["cls_w"].shape[1]
    nH = params["num_heads"]
    L = params["wqkv"].shape[0]
    F = params["w1"].shape[2]
    M = B * S
    dims = (S, H, F, nH, L, V)

    if mask is None:
        mask = jnp.ones((B, S), jnp.float32)
    mask_add = ((1.0 - mask.astype(jnp.float32)) * (-1e9)).reshape(B, 1, S)

    # Embedding gather is plain-JAX glue; everything else lives in the kernel.
    emb = (params["word_emb"][x]
           + params["pos_emb"][:S][None, :, :]
           + params["type_emb"][0][None, None, :]).reshape(M, H).astype(jnp.float32)

    vec_bank = _pack_vec_bank(params)
    weights = [params["wqkv"], params["wo"], params["w1"], params["w2"],
               params["cls_w"], vec_bank]
    weight_specs = [_const_spec(w.shape) for w in weights]

    common_in = [emb, mask_add]
    common_specs = [pl.BlockSpec((S, H), lambda b: (b, 0)),
                    pl.BlockSpec((1, 1, S), lambda b: (b, 0, 0))]

    flops = int(B * (L * (6 * S * H * H + 4 * S * S * H + 2 * S * H * H
                          + 4 * S * H * F) + 2 * S * H * V))
    transc = int(B * (L * (nH * S * S + S * F) + S * V))

    if y is not None:
        labels = y.reshape(M, 1).astype(jnp.int32)
        inputs = common_in + [labels] + weights
        in_specs = common_specs + [pl.BlockSpec((S, 1), lambda b: (b, 0))] + weight_specs
        bytes_acc = sum(int(a.size) * a.dtype.itemsize for a in inputs) + 4
        loss = pl.pallas_call(
            functools.partial(_bert_loss_kernel, dims),
            out_shape=jax.ShapeDtypeStruct((1, 1), jnp.float32),
            grid=(B,),
            in_specs=in_specs,
            out_specs=pl.BlockSpec((1, 1), lambda b: (0, 0)),
            scratch_shapes=[pltpu.VMEM((1, 1), jnp.float32),
                            pltpu.VMEM((1, 1), jnp.float32)],
            compiler_params=pltpu.CompilerParams(
                dimension_semantics=("arbitrary",)),
            cost_estimate=pl.CostEstimate(flops=flops, transcendentals=transc,
                                          bytes_accessed=bytes_acc),
        )(*inputs)
        return loss[0, 0]

    inputs = common_in + weights
    in_specs = common_specs + weight_specs
    bytes_acc = sum(int(a.size) * a.dtype.itemsize for a in inputs) + M * V * 4
    probs = pl.pallas_call(
        functools.partial(_bert_infer_kernel, dims),
        out_shape=jax.ShapeDtypeStruct((M, V), jnp.float32),
        grid=(B,),
        in_specs=in_specs,
        out_specs=pl.BlockSpec((S, V), lambda b: (b, 0)),       # lane-dense (8,128)
        compiler_params=pltpu.CompilerParams(
            dimension_semantics=("parallel",)),                  # v7x: 2 TCs
        cost_estimate=pl.CostEstimate(flops=flops, transcendentals=transc,
                                      bytes_accessed=bytes_acc),
    )(*inputs)
    return probs.reshape(B, S, V)


# ----------------------------------------------------------------------------
# Synthetic BERT parameters (pretrained-weight loading is out of scope)
# ----------------------------------------------------------------------------

def init_params(key, *, vocab=128, hidden=32, num_layers=2, num_heads=2,
                ffn=64, max_pos=64):
    H, F, L = hidden, ffn, num_layers
    bf16 = jnp.bfloat16

    def nrm(k, shape, dtype=jnp.float32):
        return (0.02 * jax.random.normal(k, shape, jnp.float32)).astype(dtype)

    keys = iter(jax.random.split(key, 16))
    return {
        "num_heads": num_heads,
        "word_emb": nrm(next(keys), (vocab, H)),
        "pos_emb": nrm(next(keys), (max_pos, H)),
        "type_emb": nrm(next(keys), (2, H)),
        "emb_ln_g": jnp.ones((H,), jnp.float32),
        "emb_ln_b": jnp.zeros((H,), jnp.float32),
        # Matmul weights stored bf16 (native MXU input); QKV fused to [H, 3H].
        "wqkv": nrm(next(keys), (L, H, 3 * H), bf16),
        "bqkv": jnp.zeros((L, 3 * H), jnp.float32),
        "wo": nrm(next(keys), (L, H, H), bf16),
        "bo": jnp.zeros((L, H), jnp.float32),
        "ln1_g": jnp.ones((L, H), jnp.float32),
        "ln1_b": jnp.zeros((L, H), jnp.float32),
        "w1": nrm(next(keys), (L, H, F), bf16),
        "b1": jnp.zeros((L, F), jnp.float32),
        "w2": nrm(next(keys), (L, F, H), bf16),
        "b2": jnp.zeros((L, H), jnp.float32),
        "ln2_g": jnp.ones((L, H), jnp.float32),
        "ln2_b": jnp.zeros((L, H), jnp.float32),
        "cls_w": nrm(next(keys), (H, vocab), bf16),
        "cls_b": jnp.zeros((vocab,), jnp.float32),
    }


# ----------------------------------------------------------------------------

if __name__ == "__main__":
    B, S, VOCAB = 2, 8, 128

    key = jax.random.PRNGKey(0)
    k_params, k_x, k_y = jax.random.split(key, 3)

    params = init_params(k_params, vocab=VOCAB, hidden=32, num_layers=2,
                         num_heads=2, ffn=64, max_pos=64)

    x = jax.random.randint(k_x, (B, S), 1, VOCAB, dtype=jnp.int32)
    y = jax.random.randint(k_y, (B, S), 0, VOCAB, dtype=jnp.int32)  # 0 = ignore
    mask = jnp.ones((B, S), jnp.float32)

    # Inference path: softmax probabilities over the vocab.
    probs = torch_model_forward(params, x)
    probs = jax.block_until_ready(probs)
    assert probs.shape == (B, S, VOCAB)
    assert bool(jnp.all(jnp.isfinite(probs)))

    # Training path: cross-entropy loss with ignore_index=0.
    loss = torch_model_forward(params, x, y=y, mask=mask)
    loss = jax.block_until_ready(loss)
    assert loss.shape == ()
    assert bool(jnp.isfinite(loss))

    print("KERNEL_OK")
</pallas_src>

<mosaic_0001>
module attributes {stable_mosaic.version = 11 : i64} {
  func.func @_bert_infer_kernel(%arg0: i32, %arg1: memref<8x32xf32, #tpu.memory_space<vmem>>, %arg2: memref<1x1x8xf32, #tpu.memory_space<vmem>>, %arg3: memref<2x32x96xbf16, #tpu.memory_space<vmem>>, %arg4: memref<2x32x32xbf16, #tpu.memory_space<vmem>>, %arg5: memref<2x32x64xbf16, #tpu.memory_space<vmem>>, %arg6: memref<2x64x32xbf16, #tpu.memory_space<vmem>>, %arg7: memref<32x128xbf16, #tpu.memory_space<vmem>>, %arg8: memref<19x128xf32, #tpu.memory_space<vmem>>, %arg9: memref<8x128xf32, #tpu.memory_space<vmem>>) attributes {dimension_semantics = [#tpu.dimension_semantics<parallel>], iteration_bounds = array<i64: 2>, scalar_prefetch = 0 : i64, scratch_operands = 0 : i64, tpu.core_type = #tpu.core_type<tc>, window_params = [{transform_indices = @transform_0, window_bounds = array<i64: 8, 32>}, {transform_indices = @transform_1, window_bounds = array<i64: 1, 1, 8>}, {pipeline_mode = #tpu.pipeline_mode<synchronous>, transform_indices = @transform_2, window_bounds = array<i64: 2, 32, 96>}, {pipeline_mode = #tpu.pipeline_mode<synchronous>, transform_indices = @transform_3, window_bounds = array<i64: 2, 32, 32>}, {pipeline_mode = #tpu.pipeline_mode<synchronous>, transform_indices = @transform_4, window_bounds = array<i64: 2, 32, 64>}, {pipeline_mode = #tpu.pipeline_mode<synchronous>, transform_indices = @transform_5, window_bounds = array<i64: 2, 64, 32>}, {pipeline_mode = #tpu.pipeline_mode<synchronous>, transform_indices = @transform_6, window_bounds = array<i64: 32, 128>}, {pipeline_mode = #tpu.pipeline_mode<synchronous>, transform_indices = @transform_7, window_bounds = array<i64: 19, 128>}, {transform_indices = @transform_8, window_bounds = array<i64: 8, 128>}]} {
    %c0 = arith.constant 0 : index
    %c0_0 = arith.constant 0 : index
    %0 = vector.load %arg1[%c0, %c0_0] : memref<8x32xf32, #tpu.memory_space<vmem>>, vector<8x32xf32>
    %c0_1 = arith.constant 0 : index
    %c0_2 = arith.constant 0 : index
    %1 = vector.load %arg8[%c0_1, %c0_2] : memref<19x128xf32, #tpu.memory_space<vmem>>, vector<1x32xf32>
    %c1 = arith.constant 1 : index
    %c0_3 = arith.constant 0 : index
    %2 = vector.load %arg8[%c1, %c0_3] : memref<19x128xf32, #tpu.memory_space<vmem>>, vector<1x32xf32>
    %cst = arith.constant dense<0.000000e+00> : vector<8xf32>
    %3 = vector.multi_reduction <add>, %0, %cst [1] : vector<8x32xf32> to vector<8xf32>
    %4 = vector.shape_cast %3 : vector<8xf32> to vector<8x1xf32>
    %cst_4 = arith.constant 3.200000e+01 : f32
    %5 = vector.broadcast %cst_4 : f32 to vector<8x1xf32>
    %6 = arith.divf %4, %5 : vector<8x1xf32>
    %7 = vector.broadcast %6 : vector<8x1xf32> to vector<8x32xf32>
    %8 = arith.subf %0, %7 : vector<8x32xf32>
    %9 = arith.mulf %8, %8 : vector<8x32xf32>
    %cst_5 = arith.constant dense<0.000000e+00> : vector<8xf32>
    %10 = vector.multi_reduction <add>, %9, %cst_5 [1] : vector<8x32xf32> to vector<8xf32>
    %11 = vector.shape_cast %10 : vector<8xf32> to vector<8x1xf32>
    %cst_6 = arith.constant 3.200000e+01 : f32
    %12 = vector.broadcast %cst_6 : f32 to vector<8x1xf32>
    %13 = arith.divf %11, %12 : vector<8x1xf32>
    %14 = vector.broadcast %6 : vector<8x1xf32> to vector<8x32xf32>
    %15 = arith.subf %0, %14 : vector<8x32xf32>
    %cst_7 = arith.constant 9.99999996E-13 : f32
    %16 = vector.broadcast %cst_7 : f32 to vector<8x1xf32>
    %17 = arith.addf %13, %16 : vector<8x1xf32>
    %18 = math.rsqrt %17 : vector<8x1xf32>
    %19 = vector.broadcast %18 : vector<8x1xf32> to vector<8x32xf32>
    %20 = arith.mulf %15, %19 : vector<8x32xf32>
    %21 = vector.broadcast %1 : vector<1x32xf32> to vector<8x32xf32>
    %22 = arith.mulf %20, %21 : vector<8x32xf32>
    %23 = vector.broadcast %2 : vector<1x32xf32> to vector<8x32xf32>
    %24 = arith.addf %22, %23 : vector<8x32xf32>
    %c0_8 = arith.constant 0 : index
    %c0_9 = arith.constant 0 : index
    %c0_10 = arith.constant 0 : index
    %25 = vector.load %arg2[%c0_8, %c0_9, %c0_10] : memref<1x1x8xf32, #tpu.memory_space<vmem>>, vector<1x1x8xf32>
    %26 = vector.shape_cast %25 : vector<1x1x8xf32> to vector<1x8xf32>
    %c0_11 = arith.constant 0 : index
    %c0_12 = arith.constant 0 : index
    %c0_13 = arith.constant 0 : index
    %27 = vector.load %arg3[%c0_11, %c0_12, %c0_13] : memref<2x32x96xbf16, #tpu.memory_space<vmem>>, vector<1x32x96xbf16>
    %28 = vector.shape_cast %27 : vector<1x32x96xbf16> to vector<32x96xbf16>
    %c0_14 = arith.constant 0 : index
    %c0_15 = arith.constant 0 : index
    %c0_16 = arith.constant 0 : index
    %29 = vector.load %arg4[%c0_14, %c0_15, %c0_16] : memref<2x32x32xbf16, #tpu.memory_space<vmem>>, vector<1x32x32xbf16>
    %30 = vector.shape_cast %29 : vector<1x32x32xbf16> to vector<32x32xbf16>
    %31 = arith.truncf %24 : vector<8x32xf32> to vector<8x32xbf16>
    %cst_17 = arith.constant dense<0.000000e+00> : vector<8x96xf32>
    %32 = tpu.matmul %31, %28, %cst_17 {dimension_numbers = #tpu.dot_dimension_numbers<[1], [0], [0], [1], [0, 0, 1, 1], [], []>} : vector<8x32xbf16>, vector<32x96xbf16>, vector<8x96xf32> -> vector<8x96xf32>
    %c2 = arith.constant 2 : index
    %c0_18 = arith.constant 0 : index
    %33 = vector.load %arg8[%c2, %c0_18] : memref<19x128xf32, #tpu.memory_space<vmem>>, vector<1x96xf32>
    %34 = vector.broadcast %33 : vector<1x96xf32> to vector<8x96xf32>
    %35 = arith.addf %32, %34 : vector<8x96xf32>
    %36 = vector.extract_strided_slice %35 {offsets = [0, 0], sizes = [8, 16], strides = [1, 1]} : vector<8x96xf32> to vector<8x16xf32>
    %37 = vector.extract_strided_slice %35 {offsets = [0, 32], sizes = [8, 16], strides = [1, 1]} : vector<8x96xf32> to vector<8x16xf32>
    %38 = vector.extract_strided_slice %35 {offsets = [0, 64], sizes = [8, 16], strides = [1, 1]} : vector<8x96xf32> to vector<8x16xf32>
    %39 = arith.truncf %36 : vector<8x16xf32> to vector<8x16xbf16>
    %40 = arith.truncf %37 : vector<8x16xf32> to vector<8x16xbf16>
    %cst_19 = arith.constant dense<0.000000e+00> : vector<8x8xf32>
    %41 = tpu.matmul %39, %40, %cst_19 {dimension_numbers = #tpu.dot_dimension_numbers<[1], [1], [0], [0], [0, 0, 1, 0], [], []>} : vector<8x16xbf16>, vector<8x16xbf16>, vector<8x8xf32> -> vector<8x8xf32>
    %cst_20 = arith.constant 2.500000e-01 : f32
    %42 = vector.broadcast %cst_20 : f32 to vector<8x8xf32>
    %43 = arith.mulf %41, %42 : vector<8x8xf32>
    %44 = vector.broadcast %26 : vector<1x8xf32> to vector<8x8xf32>
    %45 = arith.addf %43, %44 : vector<8x8xf32>
    %cst_21 = arith.constant dense<0xFF800000> : vector<8xf32>
    %46 = vector.multi_reduction <maximumf>, %45, %cst_21 [1] : vector<8x8xf32> to vector<8xf32>
    %47 = vector.shape_cast %46 : vector<8xf32> to vector<8x1xf32>
    %48 = vector.broadcast %47 : vector<8x1xf32> to vector<8x8xf32>
    %49 = arith.subf %45, %48 : vector<8x8xf32>
    %50 = math.exp %49 : vector<8x8xf32>
    %cst_22 = arith.constant dense<0.000000e+00> : vector<8xf32>
    %51 = vector.multi_reduction <add>, %50, %cst_22 [1] : vector<8x8xf32> to vector<8xf32>
    %52 = vector.shape_cast %51 : vector<8xf32> to vector<8x1xf32>
    %53 = vector.broadcast %52 : vector<8x1xf32> to vector<8x8xf32>
    %54 = arith.divf %50, %53 : vector<8x8xf32>
    %55 = arith.truncf %54 : vector<8x8xf32> to vector<8x8xbf16>
    %56 = arith.truncf %38 : vector<8x16xf32> to vector<8x16xbf16>
    %cst_23 = arith.constant dense<0.000000e+00> : vector<8x16xf32>
    %57 = tpu.matmul %55, %56, %cst_23 {dimension_numbers = #tpu.dot_dimension_numbers<[1], [0], [0], [1], [0, 0, 1, 1], [], []>} : vector<8x8xbf16>, vector<8x16xbf16>, vector<8x16xf32> -> vector<8x16xf32>
    %58 = arith.truncf %57 : vector<8x16xf32> to vector<8x16xbf16>
    %59 = vector.extract_strided_slice %30 {offsets = [0, 0], sizes = [16, 32], strides = [1, 1]} : vector<32x32xbf16> to vector<16x32xbf16>
    %cst_24 = arith.constant dense<0.000000e+00> : vector<8x32xf32>
    %60 = tpu.matmul %58, %59, %cst_24 {dimension_numbers = #tpu.dot_dimension_numbers<[1], [0], [0], [1], [0, 0, 1, 1], [], []>} : vector<8x16xbf16>, vector<16x32xbf16>, vector<8x32xf32> -> vector<8x32xf32>
    %61 = vector.extract_strided_slice %35 {offsets = [0, 16], sizes = [8, 16], strides = [1, 1]} : vector<8x96xf32> to vector<8x16xf32>
    %62 = vector.extract_strided_slice %35 {offsets = [0, 48], sizes = [8, 16], strides = [1, 1]} : vector<8x96xf32> to vector<8x16xf32>
    %63 = vector.extract_strided_slice %35 {offsets = [0, 80], sizes = [8, 16], strides = [1, 1]} : vector<8x96xf32> to vector<8x16xf32>
    %64 = arith.truncf %61 : vector<8x16xf32> to vector<8x16xbf16>
    %65 = arith.truncf %62 : vector<8x16xf32> to vector<8x16xbf16>
    %cst_25 = arith.constant dense<0.000000e+00> : vector<8x8xf32>
    %66 = tpu.matmul %64, %65, %cst_25 {dimension_numbers = #tpu.dot_dimension_numbers<[1], [1], [0], [0], [0, 0, 1, 0], [], []>} : vector<8x16xbf16>, vector<8x16xbf16>, vector<8x8xf32> -> vector<8x8xf32>
    %cst_26 = arith.constant 2.500000e-01 : f32
    %67 = vector.broadcast %cst_26 : f32 to vector<8x8xf32>
    %68 = arith.mulf %66, %67 : vector<8x8xf32>
    %69 = vector.broadcast %26 : vector<1x8xf32> to vector<8x8xf32>
    %70 = arith.addf %68, %69 : vector<8x8xf32>
    %cst_27 = arith.constant dense<0xFF800000> : vector<8xf32>
    %71 = vector.multi_reduction <maximumf>, %70, %cst_27 [1] : vector<8x8xf32> to vector<8xf32>
    %72 = vector.shape_cast %71 : vector<8xf32> to vector<8x1xf32>
    %73 = vector.broadcast %72 : vector<8x1xf32> to vector<8x8xf32>
    %74 = arith.subf %70, %73 : vector<8x8xf32>
    %75 = math.exp %74 : vector<8x8xf32>
    %cst_28 = arith.constant dense<0.000000e+00> : vector<8xf32>
    %76 = vector.multi_reduction <add>, %75, %cst_28 [1] : vector<8x8xf32> to vector<8xf32>
    %77 = vector.shape_cast %76 : vector<8xf32> to vector<8x1xf32>
    %78 = vector.broadcast %77 : vector<8x1xf32> to vector<8x8xf32>
    %79 = arith.divf %75, %78 : vector<8x8xf32>
    %80 = arith.truncf %79 : vector<8x8xf32> to vector<8x8xbf16>
    %81 = arith.truncf %63 : vector<8x16xf32> to vector<8x16xbf16>
    %cst_29 = arith.constant dense<0.000000e+00> : vector<8x16xf32>
    %82 = tpu.matmul %80, %81, %cst_29 {dimension_numbers = #tpu.dot_dimension_numbers<[1], [0], [0], [1], [0, 0, 1, 1], [], []>} : vector<8x8xbf16>, vector<8x16xbf16>, vector<8x16xf32> -> vector<8x16xf32>
    %83 = arith.truncf %82 : vector<8x16xf32> to vector<8x16xbf16>
    %84 = vector.extract_strided_slice %30 {offsets = [16, 0], sizes = [16, 32], strides = [1, 1]} : vector<32x32xbf16> to vector<16x32xbf16>
    %cst_30 = arith.constant dense<0.000000e+00> : vector<8x32xf32>
    %85 = tpu.matmul %83, %84, %cst_30 {dimension_numbers = #tpu.dot_dimension_numbers<[1], [0], [0], [1], [0, 0, 1, 1], [], []>} : vector<8x16xbf16>, vector<16x32xbf16>, vector<8x32xf32> -> vector<8x32xf32>
    %86 = arith.addf %60, %85 : vector<8x32xf32>
    %c3 = arith.constant 3 : index
    %c0_31 = arith.constant 0 : index
    %87 = vector.load %arg8[%c3, %c0_31] : memref<19x128xf32, #tpu.memory_space<vmem>>, vector<1x32xf32>
    %88 = vector.broadcast %87 : vector<1x32xf32> to vector<8x32xf32>
    %89 = arith.addf %86, %88 : vector<8x32xf32>
    %90 = arith.addf %89, %24 : vector<8x32xf32>
    %c4 = arith.constant 4 : index
    %c0_32 = arith.constant 0 : index
    %91 = vector.load %arg8[%c4, %c0_32] : memref<19x128xf32, #tpu.memory_space<vmem>>, vector<1x32xf32>
    %c5 = arith.constant 5 : index
    %c0_33 = arith.constant 0 : index
    %92 = vector.load %arg8[%c5, %c0_33] : memref<19x128xf32, #tpu.memory_space<vmem>>, vector<1x32xf32>
    %cst_34 = arith.constant dense<0.000000e+00> : vector<8xf32>
    %93 = vector.multi_reduction <add>, %90, %cst_34 [1] : vector<8x32xf32> to vector<8xf32>
    %94 = vector.shape_cast %93 : vector<8xf32> to vector<8x1xf32>
    %cst_35 = arith.constant 3.200000e+01 : f32
    %95 = vector.broadcast %cst_35 : f32 to vector<8x1xf32>
    %96 = arith.divf %94, %95 : vector<8x1xf32>
    %97 = vector.broadcast %96 : vector<8x1xf32> to vector<8x32xf32>
    %98 = arith.subf %90, %97 : vector<8x32xf32>
    %99 = arith.mulf %98, %98 : vector<8x32xf32>
    %cst_36 = arith.constant dense<0.000000e+00> : vector<8xf32>
    %100 = vector.multi_reduction <add>, %99, %cst_36 [1] : vector<8x32xf32> to vector<8xf32>
    %101 = vector.shape_cast %100 : vector<8xf32> to vector<8x1xf32>
    %cst_37 = arith.constant 3.200000e+01 : f32
    %102 = vector.broadcast %cst_37 : f32 to vector<8x1xf32>
    %103 = arith.divf %101, %102 : vector<8x1xf32>
    %104 = vector.broadcast %96 : vector<8x1xf32> to vector<8x32xf32>
    %105 = arith.subf %90, %104 : vector<8x32xf32>
    %cst_38 = arith.constant 9.99999996E-13 : f32
    %106 = vector.broadcast %cst_38 : f32 to vector<8x1xf32>
    %107 = arith.addf %103, %106 : vector<8x1xf32>
    %108 = math.rsqrt %107 : vector<8x1xf32>
    %109 = vector.broadcast %108 : vector<8x1xf32> to vector<8x32xf32>
    %110 = arith.mulf %105, %109 : vector<8x32xf32>
    %111 = vector.broadcast %91 : vector<1x32xf32> to vector<8x32xf32>
    %112 = arith.mulf %110, %111 : vector<8x32xf32>
    %113 = vector.broadcast %92 : vector<1x32xf32> to vector<8x32xf32>
    %114 = arith.addf %112, %113 : vector<8x32xf32>
    %115 = arith.truncf %114 : vector<8x32xf32> to vector<8x32xbf16>
    %c0_39 = arith.constant 0 : index
    %c0_40 = arith.constant 0 : index
    %c0_41 = arith.constant 0 : index
    %116 = vector.load %arg5[%c0_39, %c0_40, %c0_41] : memref<2x32x64xbf16, #tpu.memory_space<vmem>>, vector<1x32x64xbf16>
    %117 = vector.shape_cast %116 : vector<1x32x64xbf16> to vector<32x64xbf16>
    %cst_42 = arith.constant dense<0.000000e+00> : vector<8x64xf32>
    %118 = tpu.matmul %115, %117, %cst_42 {dimension_numbers = #tpu.dot_dimension_numbers<[1], [0], [0], [1], [0, 0, 1, 1], [], []>} : vector<8x32xbf16>, vector<32x64xbf16>, vector<8x64xf32> -> vector<8x64xf32>
    %c6 = arith.constant 6 : index
    %c0_43 = arith.constant 0 : index
    %119 = vector.load %arg8[%c6, %c0_43] : memref<19x128xf32, #tpu.memory_space<vmem>>, vector<1x64xf32>
    %120 = vector.broadcast %119 : vector<1x64xf32> to vector<8x64xf32>
    %121 = arith.addf %118, %120 : vector<8x64xf32>
    %122 = arith.mulf %121, %121 : vector<8x64xf32>
    %123 = arith.mulf %121, %122 : vector<8x64xf32>
    %cst_44 = arith.constant 4.471500e-02 : f32
    %124 = vector.broadcast %cst_44 : f32 to vector<8x64xf32>
    %125 = arith.mulf %124, %123 : vector<8x64xf32>
    %126 = arith.addf %121, %125 : vector<8x64xf32>
    %cst_45 = arith.constant 0.797884583 : f32
    %127 = vector.broadcast %cst_45 : f32 to vector<8x64xf32>
    %128 = arith.mulf %127, %126 : vector<8x64xf32>
    %129 = math.tanh %128 : vector<8x64xf32>
    %cst_46 = arith.constant 1.000000e+00 : f32
    %130 = vector.broadcast %cst_46 : f32 to vector<8x64xf32>
    %131 = arith.addf %130, %129 : vector<8x64xf32>
    %cst_47 = arith.constant 5.000000e-01 : f32
    %132 = vector.broadcast %cst_47 : f32 to vector<8x64xf32>
    %133 = arith.mulf %132, %131 : vector<8x64xf32>
    %134 = arith.mulf %121, %133 : vector<8x64xf32>
    %135 = arith.truncf %134 : vector<8x64xf32> to vector<8x64xbf16>
    %c0_48 = arith.constant 0 : index
    %c0_49 = arith.constant 0 : index
    %c0_50 = arith.constant 0 : index
    %136 = vector.load %arg6[%c0_48, %c0_49, %c0_50] : memref<2x64x32xbf16, #tpu.memory_space<vmem>>, vector<1x64x32xbf16>
    %137 = vector.shape_cast %136 : vector<1x64x32xbf16> to vector<64x32xbf16>
    %cst_51 = arith.constant dense<0.000000e+00> : vector<8x32xf32>
    %138 = tpu.matmul %135, %137, %cst_51 {dimension_numbers = #tpu.dot_dimension_numbers<[1], [0], [0], [1], [0, 0, 1, 1], [], []>} : vector<8x64xbf16>, vector<64x32xbf16>, vector<8x32xf32> -> vector<8x32xf32>
    %c7 = arith.constant 7 : index
    %c0_52 = arith.constant 0 : index
    %139 = vector.load %arg8[%c7, %c0_52] : memref<19x128xf32, #tpu.memory_space<vmem>>, vector<1x32xf32>
    %140 = vector.broadcast %139 : vector<1x32xf32> to vector<8x32xf32>
    %141 = arith.addf %138, %140 : vector<8x32xf32>
    %142 = arith.addf %141, %114 : vector<8x32xf32>
    %c8 = arith.constant 8 : index
    %c0_53 = arith.constant 0 : index
    %143 = vector.load %arg8[%c8, %c0_53] : memref<19x128xf32, #tpu.memory_space<vmem>>, vector<1x32xf32>
    %c9 = arith.constant 9 : index
    %c0_54 = arith.constant 0 : index
    %144 = vector.load %arg8[%c9, %c0_54] : memref<19x128xf32, #tpu.memory_space<vmem>>, vector<1x32xf32>
    %cst_55 = arith.constant dense<0.000000e+00> : vector<8xf32>
    %145 = vector.multi_reduction <add>, %142, %cst_55 [1] : vector<8x32xf32> to vector<8xf32>
    %146 = vector.shape_cast %145 : vector<8xf32> to vector<8x1xf32>
    %cst_56 = arith.constant 3.200000e+01 : f32
    %147 = vector.broadcast %cst_56 : f32 to vector<8x1xf32>
    %148 = arith.divf %146, %147 : vector<8x1xf32>
    %149 = vector.broadcast %148 : vector<8x1xf32> to vector<8x32xf32>
    %150 = arith.subf %142, %149 : vector<8x32xf32>
    %151 = arith.mulf %150, %150 : vector<8x32xf32>
    %cst_57 = arith.constant dense<0.000000e+00> : vector<8xf32>
    %152 = vector.multi_reduction <add>, %151, %cst_57 [1] : vector<8x32xf32> to vector<8xf32>
    %153 = vector.shape_cast %152 : vector<8xf32> to vector<8x1xf32>
    %cst_58 = arith.constant 3.200000e+01 : f32
    %154 = vector.broadcast %cst_58 : f32 to vector<8x1xf32>
    %155 = arith.divf %153, %154 : vector<8x1xf32>
    %156 = vector.broadcast %148 : vector<8x1xf32> to vector<8x32xf32>
    %157 = arith.subf %142, %156 : vector<8x32xf32>
    %cst_59 = arith.constant 9.99999996E-13 : f32
    %158 = vector.broadcast %cst_59 : f32 to vector<8x1xf32>
    %159 = arith.addf %155, %158 : vector<8x1xf32>
    %160 = math.rsqrt %159 : vector<8x1xf32>
    %161 = vector.broadcast %160 : vector<8x1xf32> to vector<8x32xf32>
    %162 = arith.mulf %157, %161 : vector<8x32xf32>
    %163 = vector.broadcast %143 : vector<1x32xf32> to vector<8x32xf32>
    %164 = arith.mulf %162, %163 : vector<8x32xf32>
    %165 = vector.broadcast %144 : vector<1x32xf32> to vector<8x32xf32>
    %166 = arith.addf %164, %165 : vector<8x32xf32>
    %c1_60 = arith.constant 1 : index
    %c0_61 = arith.constant 0 : index
    %c0_62 = arith.constant 0 : index
    %167 = vector.load %arg3[%c1_60, %c0_61, %c0_62] : memref<2x32x96xbf16, #tpu.memory_space<vmem>>, vector<1x32x96xbf16>
    %168 = vector.shape_cast %167 : vector<1x32x96xbf16> to vector<32x96xbf16>
    %c1_63 = arith.constant 1 : index
    %c0_64 = arith.constant 0 : index
    %c0_65 = arith.constant 0 : index
    %169 = vector.load %arg4[%c1_63, %c0_64, %c0_65] : memref<2x32x32xbf16, #tpu.memory_space<vmem>>, vector<1x32x32xbf16>
    %170 = vector.shape_cast %169 : vector<1x32x32xbf16> to vector<32x32xbf16>
    %171 = arith.truncf %166 : vector<8x32xf32> to vector<8x32xbf16>
    %cst_66 = arith.constant dense<0.000000e+00> : vector<8x96xf32>
    %172 = tpu.matmul %171, %168, %cst_66 {dimension_numbers = #tpu.dot_dimension_numbers<[1], [0], [0], [1], [0, 0, 1, 1], [], []>} : vector<8x32xbf16>, vector<32x96xbf16>, vector<8x96xf32> -> vector<8x96xf32>
    %c10 = arith.constant 10 : index
    %c0_67 = arith.constant 0 : index
    %173 = vector.load %arg8[%c10, %c0_67] : memref<19x128xf32, #tpu.memory_space<vmem>>, vector<1x96xf32>
    %174 = vector.broadcast %173 : vector<1x96xf32> to vector<8x96xf32>
    %175 = arith.addf %172, %174 : vector<8x96xf32>
    %176 = vector.extract_strided_slice %175 {offsets = [0, 0], sizes = [8, 16], strides = [1, 1]} : vector<8x96xf32> to vector<8x16xf32>
    %177 = vector.extract_strided_slice %175 {offsets = [0, 32], sizes = [8, 16], strides = [1, 1]} : vector<8x96xf32> to vector<8x16xf32>
    %178 = vector.extract_strided_slice %175 {offsets = [0, 64], sizes = [8, 16], strides = [1, 1]} : vector<8x96xf32> to vector<8x16xf32>
    %179 = arith.truncf %176 : vector<8x16xf32> to vector<8x16xbf16>
    %180 = arith.truncf %177 : vector<8x16xf32> to vector<8x16xbf16>
    %cst_68 = arith.constant dense<0.000000e+00> : vector<8x8xf32>
    %181 = tpu.matmul %179, %180, %cst_68 {dimension_numbers = #tpu.dot_dimension_numbers<[1], [1], [0], [0], [0, 0, 1, 0], [], []>} : vector<8x16xbf16>, vector<8x16xbf16>, vector<8x8xf32> -> vector<8x8xf32>
    %cst_69 = arith.constant 2.500000e-01 : f32
    %182 = vector.broadcast %cst_69 : f32 to vector<8x8xf32>
    %183 = arith.mulf %181, %182 : vector<8x8xf32>
    %184 = vector.broadcast %26 : vector<1x8xf32> to vector<8x8xf32>
    %185 = arith.addf %183, %184 : vector<8x8xf32>
    %cst_70 = arith.constant dense<0xFF800000> : vector<8xf32>
    %186 = vector.multi_reduction <maximumf>, %185, %cst_70 [1] : vector<8x8xf32> to vector<8xf32>
    %187 = vector.shape_cast %186 : vector<8xf32> to vector<8x1xf32>
    %188 = vector.broadcast %187 : vector<8x1xf32> to vector<8x8xf32>
    %189 = arith.subf %185, %188 : vector<8x8xf32>
    %190 = math.exp %189 : vector<8x8xf32>
    %cst_71 = arith.constant dense<0.000000e+00> : vector<8xf32>
    %191 = vector.multi_reduction <add>, %190, %cst_71 [1] : vector<8x8xf32> to vector<8xf32>
    %192 = vector.shape_cast %191 : vector<8xf32> to vector<8x1xf32>
    %193 = vector.broadcast %192 : vector<8x1xf32> to vector<8x8xf32>
    %194 = arith.divf %190, %193 : vector<8x8xf32>
    %195 = arith.truncf %194 : vector<8x8xf32> to vector<8x8xbf16>
    %196 = arith.truncf %178 : vector<8x16xf32> to vector<8x16xbf16>
    %cst_72 = arith.constant dense<0.000000e+00> : vector<8x16xf32>
    %197 = tpu.matmul %195, %196, %cst_72 {dimension_numbers = #tpu.dot_dimension_numbers<[1], [0], [0], [1], [0, 0, 1, 1], [], []>} : vector<8x8xbf16>, vector<8x16xbf16>, vector<8x16xf32> -> vector<8x16xf32>
    %198 = arith.truncf %197 : vector<8x16xf32> to vector<8x16xbf16>
    %199 = vector.extract_strided_slice %170 {offsets = [0, 0], sizes = [16, 32], strides = [1, 1]} : vector<32x32xbf16> to vector<16x32xbf16>
    %cst_73 = arith.constant dense<0.000000e+00> : vector<8x32xf32>
    %200 = tpu.matmul %198, %199, %cst_73 {dimension_numbers = #tpu.dot_dimension_numbers<[1], [0], [0], [1], [0, 0, 1, 1], [], []>} : vector<8x16xbf16>, vector<16x32xbf16>, vector<8x32xf32> -> vector<8x32xf32>
    %201 = vector.extract_strided_slice %175 {offsets = [0, 16], sizes = [8, 16], strides = [1, 1]} : vector<8x96xf32> to vector<8x16xf32>
    %202 = vector.extract_strided_slice %175 {offsets = [0, 48], sizes = [8, 16], strides = [1, 1]} : vector<8x96xf32> to vector<8x16xf32>
    %203 = vector.extract_strided_slice %175 {offsets = [0, 80], sizes = [8, 16], strides = [1, 1]} : vector<8x96xf32> to vector<8x16xf32>
    %204 = arith.truncf %201 : vector<8x16xf32> to vector<8x16xbf16>
    %205 = arith.truncf %202 : vector<8x16xf32> to vector<8x16xbf16>
    %cst_74 = arith.constant dense<0.000000e+00> : vector<8x8xf32>
    %206 = tpu.matmul %204, %205, %cst_74 {dimension_numbers = #tpu.dot_dimension_numbers<[1], [1], [0], [0], [0, 0, 1, 0], [], []>} : vector<8x16xbf16>, vector<8x16xbf16>, vector<8x8xf32> -> vector<8x8xf32>
    %cst_75 = arith.constant 2.500000e-01 : f32
    %207 = vector.broadcast %cst_75 : f32 to vector<8x8xf32>
    %208 = arith.mulf %206, %207 : vector<8x8xf32>
    %209 = vector.broadcast %26 : vector<1x8xf32> to vector<8x8xf32>
    %210 = arith.addf %208, %209 : vector<8x8xf32>
    %cst_76 = arith.constant dense<0xFF800000> : vector<8xf32>
    %211 = vector.multi_reduction <maximumf>, %210, %cst_76 [1] : vector<8x8xf32> to vector<8xf32>
    %212 = vector.shape_cast %211 : vector<8xf32> to vector<8x1xf32>
    %213 = vector.broadcast %212 : vector<8x1xf32> to vector<8x8xf32>
    %214 = arith.subf %210, %213 : vector<8x8xf32>
    %215 = math.exp %214 : vector<8x8xf32>
    %cst_77 = arith.constant dense<0.000000e+00> : vector<8xf32>
    %216 = vector.multi_reduction <add>, %215, %cst_77 [1] : vector<8x8xf32> to vector<8xf32>
    %217 = vector.shape_cast %216 : vector<8xf32> to vector<8x1xf32>
    %218 = vector.broadcast %217 : vector<8x1xf32> to vector<8x8xf32>
    %219 = arith.divf %215, %218 : vector<8x8xf32>
    %220 = arith.truncf %219 : vector<8x8xf32> to vector<8x8xbf16>
    %221 = arith.truncf %203 : vector<8x16xf32> to vector<8x16xbf16>
    %cst_78 = arith.constant dense<0.000000e+00> : vector<8x16xf32>
    %222 = tpu.matmul %220, %221, %cst_78 {dimension_numbers = #tpu.dot_dimension_numbers<[1], [0], [0], [1], [0, 0, 1, 1], [], []>} : vector<8x8xbf16>, vector<8x16xbf16>, vector<8x16xf32> -> vector<8x16xf32>
    %223 = arith.truncf %222 : vector<8x16xf32> to vector<8x16xbf16>
    %224 = vector.extract_strided_slice %170 {offsets = [16, 0], sizes = [16, 32], strides = [1, 1]} : vector<32x32xbf16> to vector<16x32xbf16>
    %cst_79 = arith.constant dense<0.000000e+00> : vector<8x32xf32>
    %225 = tpu.matmul %223, %224, %cst_79 {dimension_numbers = #tpu.dot_dimension_numbers<[1], [0], [0], [1], [0, 0, 1, 1], [], []>} : vector<8x16xbf16>, vector<16x32xbf16>, vector<8x32xf32> -> vector<8x32xf32>
    %226 = arith.addf %200, %225 : vector<8x32xf32>
    %c11 = arith.constant 11 : index
    %c0_80 = arith.constant 0 : index
    %227 = vector.load %arg8[%c11, %c0_80] : memref<19x128xf32, #tpu.memory_space<vmem>>, vector<1x32xf32>
    %228 = vector.broadcast %227 : vector<1x32xf32> to vector<8x32xf32>
    %229 = arith.addf %226, %228 : vector<8x32xf32>
    %230 = arith.addf %229, %166 : vector<8x32xf32>
    %c12 = arith.constant 12 : index
    %c0_81 = arith.constant 0 : index
    %231 = vector.load %arg8[%c12, %c0_81] : memref<19x128xf32, #tpu.memory_space<vmem>>, vector<1x32xf32>
    %c13 = arith.constant 13 : index
    %c0_82 = arith.constant 0 : index
    %232 = vector.load %arg8[%c13, %c0_82] : memref<19x128xf32, #tpu.memory_space<vmem>>, vector<1x32xf32>
    %cst_83 = arith.constant dense<0.000000e+00> : vector<8xf32>
    %233 = vector.multi_reduction <add>, %230, %cst_83 [1] : vector<8x32xf32> to vector<8xf32>
    %234 = vector.shape_cast %233 : vector<8xf32> to vector<8x1xf32>
    %cst_84 = arith.constant 3.200000e+01 : f32
    %235 = vector.broadcast %cst_84 : f32 to vector<8x1xf32>
    %236 = arith.divf %234, %235 : vector<8x1xf32>
    %237 = vector.broadcast %236 : vector<8x1xf32> to vector<8x32xf32>
    %238 = arith.subf %230, %237 : vector<8x32xf32>
    %239 = arith.mulf %238, %238 : vector<8x32xf32>
    %cst_85 = arith.constant dense<0.000000e+00> : vector<8xf32>
    %240 = vector.multi_reduction <add>, %239, %cst_85 [1] : vector<8x32xf32> to vector<8xf32>
    %241 = vector.shape_cast %240 : vector<8xf32> to vector<8x1xf32>
    %cst_86 = arith.constant 3.200000e+01 : f32
    %242 = vector.broadcast %cst_86 : f32 to vector<8x1xf32>
    %243 = arith.divf %241, %242 : vector<8x1xf32>
    %244 = vector.broadcast %236 : vector<8x1xf32> to vector<8x32xf32>
    %245 = arith.subf %230, %244 : vector<8x32xf32>
    %cst_87 = arith.constant 9.99999996E-13 : f32
    %246 = vector.broadcast %cst_87 : f32 to vector<8x1xf32>
    %247 = arith.addf %243, %246 : vector<8x1xf32>
    %248 = math.rsqrt %247 : vector<8x1xf32>
    %249 = vector.broadcast %248 : vector<8x1xf32> to vector<8x32xf32>
    %250 = arith.mulf %245, %249 : vector<8x32xf32>
    %251 = vector.broadcast %231 : vector<1x32xf32> to vector<8x32xf32>
    %252 = arith.mulf %250, %251 : vector<8x32xf32>
    %253 = vector.broadcast %232 : vector<1x32xf32> to vector<8x32xf32>
    %254 = arith.addf %252, %253 : vector<8x32xf32>
    %255 = arith.truncf %254 : vector<8x32xf32> to vector<8x32xbf16>
    %c1_88 = arith.constant 1 : index
    %c0_89 = arith.constant 0 : index
    %c0_90 = arith.constant 0 : index
    %256 = vector.load %arg5[%c1_88, %c0_89, %c0_90] : memref<2x32x64xbf16, #tpu.memory_space<vmem>>, vector<1x32x64xbf16>
    %257 = vector.shape_cast %256 : vector<1x32x64xbf16> to vector<32x64xbf16>
    %cst_91 = arith.constant dense<0.000000e+00> : vector<8x64xf32>
    %258 = tpu.matmul %255, %257, %cst_91 {dimension_numbers = #tpu.dot_dimension_numbers<[1], [0], [0], [1], [0, 0, 1, 1], [], []>} : vector<8x32xbf16>, vector<32x64xbf16>, vector<8x64xf32> -> vector<8x64xf32>
    %c14 = arith.constant 14 : index
    %c0_92 = arith.constant 0 : index
    %259 = vector.load %arg8[%c14, %c0_92] : memref<19x128xf32, #tpu.memory_space<vmem>>, vector<1x64xf32>
    %260 = vector.broadcast %259 : vector<1x64xf32> to vector<8x64xf32>
    %261 = arith.addf %258, %260 : vector<8x64xf32>
    %262 = arith.mulf %261, %261 : vector<8x64xf32>
    %263 = arith.mulf %261, %262 : vector<8x64xf32>
    %cst_93 = arith.constant 4.471500e-02 : f32
    %264 = vector.broadcast %cst_93 : f32 to vector<8x64xf32>
    %265 = arith.mulf %264, %263 : vector<8x64xf32>
    %266 = arith.addf %261, %265 : vector<8x64xf32>
    %cst_94 = arith.constant 0.797884583 : f32
    %267 = vector.broadcast %cst_94 : f32 to vector<8x64xf32>
    %268 = arith.mulf %267, %266 : vector<8x64xf32>
    %269 = math.tanh %268 : vector<8x64xf32>
    %cst_95 = arith.constant 1.000000e+00 : f32
    %270 = vector.broadcast %cst_95 : f32 to vector<8x64xf32>
    %271 = arith.addf %270, %269 : vector<8x64xf32>
    %cst_96 = arith.constant 5.000000e-01 : f32
    %272 = vector.broadcast %cst_96 : f32 to vector<8x64xf32>
    %273 = arith.mulf %272, %271 : vector<8x64xf32>
    %274 = arith.mulf %261, %273 : vector<8x64xf32>
    %275 = arith.truncf %274 : vector<8x64xf32> to vector<8x64xbf16>
    %c1_97 = arith.constant 1 : index
    %c0_98 = arith.constant 0 : index
    %c0_99 = arith.constant 0 : index
    %276 = vector.load %arg6[%c1_97, %c0_98, %c0_99] : memref<2x64x32xbf16, #tpu.memory_space<vmem>>, vector<1x64x32xbf16>
    %277 = vector.shape_cast %276 : vector<1x64x32xbf16> to vector<64x32xbf16>
    %cst_100 = arith.constant dense<0.000000e+00> : vector<8x32xf32>
    %278 = tpu.matmul %275, %277, %cst_100 {dimension_numbers = #tpu.dot_dimension_numbers<[1], [0], [0], [1], [0, 0, 1, 1], [], []>} : vector<8x64xbf16>, vector<64x32xbf16>, vector<8x32xf32> -> vector<8x32xf32>
    %c15 = arith.constant 15 : index
    %c0_101 = arith.constant 0 : index
    %279 = vector.load %arg8[%c15, %c0_101] : memref<19x128xf32, #tpu.memory_space<vmem>>, vector<1x32xf32>
    %280 = vector.broadcast %279 : vector<1x32xf32> to vector<8x32xf32>
    %281 = arith.addf %278, %280 : vector<8x32xf32>
    %282 = arith.addf %281, %254 : vector<8x32xf32>
    %c16 = arith.constant 16 : index
    %c0_102 = arith.constant 0 : index
    %283 = vector.load %arg8[%c16, %c0_102] : memref<19x128xf32, #tpu.memory_space<vmem>>, vector<1x32xf32>
    %c17 = arith.constant 17 : index
    %c0_103 = arith.constant 0 : index
    %284 = vector.load %arg8[%c17, %c0_103] : memref<19x128xf32, #tpu.memory_space<vmem>>, vector<1x32xf32>
    %cst_104 = arith.constant dense<0.000000e+00> : vector<8xf32>
    %285 = vector.multi_reduction <add>, %282, %cst_104 [1] : vector<8x32xf32> to vector<8xf32>
    %286 = vector.shape_cast %285 : vector<8xf32> to vector<8x1xf32>
    %cst_105 = arith.constant 3.200000e+01 : f32
    %287 = vector.broadcast %cst_105 : f32 to vector<8x1xf32>
    %288 = arith.divf %286, %287 : vector<8x1xf32>
    %289 = vector.broadcast %288 : vector<8x1xf32> to vector<8x32xf32>
    %290 = arith.subf %282, %289 : vector<8x32xf32>
    %291 = arith.mulf %290, %290 : vector<8x32xf32>
    %cst_106 = arith.constant dense<0.000000e+00> : vector<8xf32>
    %292 = vector.multi_reduction <add>, %291, %cst_106 [1] : vector<8x32xf32> to vector<8xf32>
    %293 = vector.shape_cast %292 : vector<8xf32> to vector<8x1xf32>
    %cst_107 = arith.constant 3.200000e+01 : f32
    %294 = vector.broadcast %cst_107 : f32 to vector<8x1xf32>
    %295 = arith.divf %293, %294 : vector<8x1xf32>
    %296 = vector.broadcast %288 : vector<8x1xf32> to vector<8x32xf32>
    %297 = arith.subf %282, %296 : vector<8x32xf32>
    %cst_108 = arith.constant 9.99999996E-13 : f32
    %298 = vector.broadcast %cst_108 : f32 to vector<8x1xf32>
    %299 = arith.addf %295, %298 : vector<8x1xf32>
    %300 = math.rsqrt %299 : vector<8x1xf32>
    %301 = vector.broadcast %300 : vector<8x1xf32> to vector<8x32xf32>
    %302 = arith.mulf %297, %301 : vector<8x32xf32>
    %303 = vector.broadcast %283 : vector<1x32xf32> to vector<8x32xf32>
    %304 = arith.mulf %302, %303 : vector<8x32xf32>
    %305 = vector.broadcast %284 : vector<1x32xf32> to vector<8x32xf32>
    %306 = arith.addf %304, %305 : vector<8x32xf32>
    %307 = arith.truncf %306 : vector<8x32xf32> to vector<8x32xbf16>
    %c0_109 = arith.constant 0 : index
    %c0_110 = arith.constant 0 : index
    %308 = vector.load %arg7[%c0_109, %c0_110] : memref<32x128xbf16, #tpu.memory_space<vmem>>, vector<32x128xbf16>
    %cst_111 = arith.constant dense<0.000000e+00> : vector<8x128xf32>
    %309 = tpu.matmul %307, %308, %cst_111 {dimension_numbers = #tpu.dot_dimension_numbers<[1], [0], [0], [1], [0, 0, 1, 1], [], []>} : vector<8x32xbf16>, vector<32x128xbf16>, vector<8x128xf32> -> vector<8x128xf32>
    %c18 = arith.constant 18 : index
    %c0_112 = arith.constant 0 : index
    %310 = vector.load %arg8[%c18, %c0_112] : memref<19x128xf32, #tpu.memory_space<vmem>>, vector<1x128xf32>
    %311 = vector.broadcast %310 : vector<1x128xf32> to vector<8x128xf32>
    %312 = arith.addf %309, %311 : vector<8x128xf32>
    %cst_113 = arith.constant dense<0xFF800000> : vector<8xf32>
    %313 = vector.multi_reduction <maximumf>, %312, %cst_113 [1] : vector<8x128xf32> to vector<8xf32>
    %314 = vector.shape_cast %313 : vector<8xf32> to vector<8x1xf32>
    %315 = vector.broadcast %314 : vector<8x1xf32> to vector<8x128xf32>
    %316 = arith.subf %312, %315 : vector<8x128xf32>
    %317 = math.exp %316 : vector<8x128xf32>
    %cst_114 = arith.constant dense<0.000000e+00> : vector<8xf32>
    %318 = vector.multi_reduction <add>, %317, %cst_114 [1] : vector<8x128xf32> to vector<8xf32>
    %319 = vector.shape_cast %318 : vector<8xf32> to vector<8x1xf32>
    %320 = vector.broadcast %319 : vector<8x1xf32> to vector<8x128xf32>
    %321 = arith.divf %317, %320 : vector<8x128xf32>
    %c0_115 = arith.constant 0 : index
    %c0_116 = arith.constant 0 : index
    %322 = vector.load %arg9[%c0_115, %c0_116] : memref<8x128xf32, #tpu.memory_space<vmem>>, vector<8x128xf32>
    tpu.vector_store %arg9[%c0_115, %c0_116], %321 {strides = array<i32>} : memref<8x128xf32, #tpu.memory_space<vmem>>, vector<8x128xf32>,
    return
  }
  func.func @transform_0(%arg0: i32) -> (i32, i32) {
    %c0_i32 = arith.constant 0 : i32
    %c0_i32_0 = arith.constant 0 : i32
    return %arg0, %c0_i32 : i32, i32
  }
  func.func @transform_1(%arg0: i32) -> (i32, i32, i32) {
    %c0_i32 = arith.constant 0 : i32
    %c0_i32_0 = arith.constant 0 : i32
    %c0_i32_1 = arith.constant 0 : i32
    return %arg0, %c0_i32, %c0_i32_0 : i32, i32, i32
  }
  func.func @transform_2(%arg0: i32) -> (i32, i32, i32) {
    %c0_i32 = arith.constant 0 : i32
    %c0_i32_0 = arith.constant 0 : i32
    %c0_i32_1 = arith.constant 0 : i32
    %c0_i32_2 = arith.constant 0 : i32
    return %c0_i32, %c0_i32_0, %c0_i32_1 : i32, i32, i32
  }
  func.func @transform_3(%arg0: i32) -> (i32, i32, i32) {
    %c0_i32 = arith.constant 0 : i32
    %c0_i32_0 = arith.constant 0 : i32
    %c0_i32_1 = arith.constant 0 : i32
    %c0_i32_2 = arith.constant 0 : i32
    return %c0_i32, %c0_i32_0, %c0_i32_1 : i32, i32, i32
  }
  func.func @transform_4(%arg0: i32) -> (i32, i32, i32) {
    %c0_i32 = arith.constant 0 : i32
    %c0_i32_0 = arith.constant 0 : i32
    %c0_i32_1 = arith.constant 0 : i32
    %c0_i32_2 = arith.constant 0 : i32
    return %c0_i32, %c0_i32_0, %c0_i32_1 : i32, i32, i32
  }
  func.func @transform_5(%arg0: i32) -> (i32, i32, i32) {
    %c0_i32 = arith.constant 0 : i32
    %c0_i32_0 = arith.constant 0 : i32
    %c0_i32_1 = arith.constant 0 : i32
    %c0_i32_2 = arith.constant 0 : i32
    return %c0_i32, %c0_i32_0, %c0_i32_1 : i32, i32, i32
  }
  func.func @transform_6(%arg0: i32) -> (i32, i32) {
    %c0_i32 = arith.constant 0 : i32
    %c0_i32_0 = arith.constant 0 : i32
    %c0_i32_1 = arith.constant 0 : i32
    return %c0_i32, %c0_i32_0 : i32, i32
  }
  func.func @transform_7(%arg0: i32) -> (i32, i32) {
    %c0_i32 = arith.constant 0 : i32
    %c0_i32_0 = arith.constant 0 : i32
    %c0_i32_1 = arith.constant 0 : i32
    return %c0_i32, %c0_i32_0 : i32, i32
  }
  func.func @transform_8(%arg0: i32) -> (i32, i32) {
    %c0_i32 = arith.constant 0 : i32
    %c0_i32_0 = arith.constant 0 : i32
    return %arg0, %c0_i32 : i32, i32
  }
}

</mosaic_0001>

<llo_original>
// kernel: tpu_custom_call.1
$region0: #{tpu_custom_call.1}
  #allocation0 [shape = 'u32[]', space=smem, size = 0x4, offset = 0x4, fixed_abs, tag = 'smem constant byte address 0x4 - core index']
  #allocation1 [shape = 'u32[72,128]{1,0:T(1,128)}', space=vmem, size = 0x9000, scoped, tag = 'internal scratch']
  %s0 = inlined_call_operand.hbm [shape: f32[16,32], index: 0, kind: input, shape index: {}]
  %s1 = inlined_call_operand.hbm [shape: f32[2,1,8], index: 1, kind: input, shape index: {}]
  %s2 = inlined_call_operand.vmem [shape: bf16[2,32,96], index: 2, kind: input, shape index: {}]
  %s3 = inlined_call_operand.vmem [shape: bf16[2,32,32], index: 3, kind: input, shape index: {}]
  %s4 = inlined_call_operand.vmem [shape: bf16[2,32,64], index: 4, kind: input, shape index: {}]
  %s5 = inlined_call_operand.vmem [shape: bf16[2,64,32], index: 5, kind: input, shape index: {}]
  %s6 = inlined_call_operand.hbm [shape: bf16[32,128], index: 6, kind: input, shape index: {}]
  %s7 = inlined_call_operand.hbm [shape: f32[19,128], index: 7, kind: input, shape index: {}]
  %s8 = inlined_call_operand.hbm [shape: f32[16,128], index: 8, kind: output, shape index: {}]
  %s9 = sld [smem:[#allocation0]]
  $region81: #{tpu_custom_call.1} parent=0
    _
  %s11 = ssub.s32 1, %s9
  %s12 = scalar_select 0, %s11, %s9
  $region1: #{tpu_custom_call.1} parent=0
    #allocation2 [shape = 'u8[8192]{0}', space=vmem, size = 0x2000, scoped, tag = 'input window, operand 0']
    #allocation3 [shape = 's32[2]{0}', space=sflag, size = 0x8, scoped, tag = 'scoped memory for tpu_custom_call.1']
    #allocation4 [shape = 's32[2]{0}', space=sflag, size = 0x8, scoped, tag = 'scoped memory for tpu_custom_call.1']
    #allocation5 [shape = 'u8[1024]{0}', space=vmem, size = 0x400, scoped, tag = 'input window, operand 1']
    #allocation6 [shape = 's32[2]{0}', space=sflag, size = 0x8, scoped, tag = 'scoped memory for tpu_custom_call.1']
    #allocation7 [shape = 'u8[8192]{0}', space=vmem, size = 0x2000, scoped, tag = 'input window, operand 6, single buffered']
    #allocation8 [shape = 'u8[12288]{0}', space=vmem, size = 0x3000, scoped, tag = 'input window, operand 7, single buffered']
    #allocation9 [shape = 's32[1]{0}', space=sflag, size = 0x4, scoped, tag = 'scoped memory for tpu_custom_call.1']
    #allocation10 [shape = 'u8[8192]{0}', space=vmem, size = 0x2000, scoped, tag = 'output window, operand 0']
    %13 = vsyncpa [#allocation3], 0
    %s14 = scalar_lea.sflag [#allocation3], 1
    %15 = vsyncpa %s14, 0
    %16 = vsyncpa [#allocation6], 0
    %s17 = scalar_lea.sflag [#allocation6], 1
    %18 = vsyncpa %s17, 0
    %19 = vsyncpa [#allocation9], 0
    %20 = vsyncpa [#allocation4], 0
    %s21 = scalar_lea.sflag [#allocation4], 1
    %22 = vsyncpa %s21, 0
    loop: start=0, step=1, limit=4
    $region2: #{tpu_custom_call.1} parent=1 // loop_pre_header
      _
    $region3: #{tpu_custom_call.1} parent=1 // loop_header
      %s24 = sphi 0, %s28
      %p25 = scmp.ge.s32.totalorder %s24, 4
      %s34 = sphi 0, %s36
      %s37 = sphi 0, %s34
      %s38 = sphi 0, %s37
      %s54 = sphi 0, %s38
      %s60 = sphi 0, %s62
      %s63 = sphi 0, %s60
      %s64 = sphi 0, %s63
      %s80 = sphi 0, %s64
      %s84 = sphi 0, %s84
      %s86 = sphi 0, %s84
      %s87 = sphi 0, %s86
      %s101 = sphi 0, %s87
      %s105 = sphi 0, %s105
      %s107 = sphi 0, %s105
      %s108 = sphi 0, %s107
      %s122 = sphi 0, %s108
      %s126 = sphi 0, %s126
      %s128 = sphi 0, %s126
      %s129 = sphi 0, %s128
      %s143 = sphi 0, %s129
      %s147 = sphi 0, %s147
      %s149 = sphi 0, %s147
      %s150 = sphi 0, %s149
      %s164 = sphi 0, %s150
      %s168 = sphi 0, %s168
      %s170 = sphi 0, %s168
      %s171 = sphi 0, %s170
      %s185 = sphi 0, %s171
      %s189 = sphi 0, %s189
      %s191 = sphi 0, %s189
      %s192 = sphi 0, %s191
      %s206 = sphi 0, %s192
      %s212 = sphi 0, %s214
      %s215 = sphi 0, %s212
      %s216 = sphi 0, %s215
      %s232 = sphi 0, %s216
    $region4: #{tpu_custom_call.1} parent=1 // loop_header_branch
      %27 = sbr.rel (%p25) target = $region8
    $region5: #{tpu_custom_call.1} parent=1 // loop_body
      %s29 = ssub.s32 %s24, 1
      %s30 = ssub.s32 %s24, 2
      %s31 = sadd.s32 %s24, 1
      %s32 = ssub.s32 %s24, %s31
      %p33 = scmp.eq.s32.totalorder %s32, 0
      %s35 = sadd.s32 %s34, 1
      %s36 = scalar_select %p33, %s34, %s35
      %p39 = pneg %p33
      %p40 = scmp.eq.s32.totalorder %s24, 1
      %p41 = por %p39, %p40
      %p42 = scmp.ne.s32.totalorder %s34, %s37
      %p43 = scmp.eq.s32.totalorder %s24, 0
      %p44 = por %p42, %p43
      %p45 = scmp.ne.s32.totalorder %s34, %s37
      %p46 = scmp.eq.s32.totalorder %s29, 1
      %p47 = por %p45, %p46
      %p48 = scmp.ne.s32.totalorder %s37, %s38
      %p49 = scmp.eq.s32.totalorder %s29, 0
      %p50 = por %p48, %p49
      %p51 = scmp.ne.s32.totalorder %s37, %s38
      %p52 = scmp.eq.s32.totalorder %s30, 1
      %p53 = por %p51, %p52
      %p55 = scmp.ne.s32.totalorder %s38, %s54
      %p56 = scmp.eq.s32.totalorder %s30, 0
      %p57 = por %p55, %p56
      %s58 = ssub.s32 %s24, %s31
      %p59 = scmp.eq.s32.totalorder %s58, 0
      %s61 = sadd.s32 %s60, 1
      %s62 = scalar_select %p59, %s60, %s61
      %p65 = pneg %p59
      %p66 = scmp.eq.s32.totalorder %s24, 1
      %p67 = por %p65, %p66
      %p68 = scmp.ne.s32.totalorder %s60, %s63
      %p69 = scmp.eq.s32.totalorder %s24, 0
      %p70 = por %p68, %p69
      %p71 = scmp.ne.s32.totalorder %s60, %s63
      %p72 = scmp.eq.s32.totalorder %s29, 1
      %p73 = por %p71, %p72
      %p74 = scmp.ne.s32.totalorder %s63, %s64
      %p75 = scmp.eq.s32.totalorder %s29, 0
      %p76 = por %p74, %p75
      %p77 = scmp.ne.s32.totalorder %s63, %s64
      %p78 = scmp.eq.s32.totalorder %s30, 1
      %p79 = por %p77, %p78
      %p81 = scmp.ne.s32.totalorder %s64, %s80
      %p82 = scmp.eq.s32.totalorder %s30, 0
      %p83 = por %p81, %p82
      %s85 = sadd.s32 %s84, 1
      %p88 = scmp.eq.s32.totalorder %s24, 1
      %p89 = scmp.ne.s32.totalorder %s84, %s86
      %p90 = scmp.eq.s32.totalorder %s24, 0
      %p91 = por %p89, %p90
      %p92 = scmp.ne.s32.totalorder %s84, %s86
      %p93 = scmp.eq.s32.totalorder %s29, 1
      %p94 = por %p92, %p93
      %p95 = scmp.ne.s32.totalorder %s86, %s87
      %p96 = scmp.eq.s32.totalorder %s29, 0
      %p97 = por %p95, %p96
      %p98 = scmp.ne.s32.totalorder %s86, %s87
      %p99 = scmp.eq.s32.totalorder %s30, 1
      %p100 = por %p98, %p99
      %p102 = scmp.ne.s32.totalorder %s87, %s101
      %p103 = scmp.eq.s32.totalorder %s30, 0
      %p104 = por %p102, %p103
      %s106 = sadd.s32 %s105, 1
      %p109 = scmp.eq.s32.totalorder %s24, 1
      %p110 = scmp.ne.s32.totalorder %s105, %s107
      %p111 = scmp.eq.s32.totalorder %s24, 0
      %p112 = por %p110, %p111
      %p113 = scmp.ne.s32.totalorder %s105, %s107
      %p114 = scmp.eq.s32.totalorder %s29, 1
      %p115 = por %p113, %p114
      %p116 = scmp.ne.s32.totalorder %s107, %s108
      %p117 = scmp.eq.s32.totalorder %s29, 0
      %p118 = por %p116, %p117
      %p119 = scmp.ne.s32.totalorder %s107, %s108
      %p120 = scmp.eq.s32.totalorder %s30, 1
      %p121 = por %p119, %p120
      %p123 = scmp.ne.s32.totalorder %s108, %s122
      %p124 = scmp.eq.s32.totalorder %s30, 0
      %p125 = por %p123, %p124
      %s127 = sadd.s32 %s126, 1
      %p130 = scmp.eq.s32.totalorder %s24, 1
      %p131 = scmp.ne.s32.totalorder %s126, %s128
      %p132 = scmp.eq.s32.totalorder %s24, 0
      %p133 = por %p131, %p132
      %p134 = scmp.ne.s32.totalorder %s126, %s128
      %p135 = scmp.eq.s32.totalorder %s29, 1
      %p136 = por %p134, %p135
      %p137 = scmp.ne.s32.totalorder %s128, %s129
      %p138 = scmp.eq.s32.totalorder %s29, 0
      %p139 = por %p137, %p138
      %p140 = scmp.ne.s32.totalorder %s128, %s129
      %p141 = scmp.eq.s32.totalorder %s30, 1
      %p142 = por %p140, %p141
      %p144 = scmp.ne.s32.totalorder %s129, %s143
      %p145 = scmp.eq.s32.totalorder %s30, 0
      %p146 = por %p144, %p145
      %s148 = sadd.s32 %s147, 1
      %p151 = scmp.eq.s32.totalorder %s24, 1
      %p152 = scmp.ne.s32.totalorder %s147, %s149
      %p153 = scmp.eq.s32.totalorder %s24, 0
      %p154 = por %p152, %p153
      %p155 = scmp.ne.s32.totalorder %s147, %s149
      %p156 = scmp.eq.s32.totalorder %s29, 1
      %p157 = por %p155, %p156
      %p158 = scmp.ne.s32.totalorder %s149, %s150
      %p159 = scmp.eq.s32.totalorder %s29, 0
      %p160 = por %p158, %p159
      %p161 = scmp.ne.s32.totalorder %s149, %s150
      %p162 = scmp.eq.s32.totalorder %s30, 1
      %p163 = por %p161, %p162
      %p165 = scmp.ne.s32.totalorder %s150, %s164
      %p166 = scmp.eq.s32.totalorder %s30, 0
      %p167 = por %p165, %p166
      %s169 = sadd.s32 %s168, 1
      %p172 = scmp.eq.s32.totalorder %s24, 1
      %p173 = scmp.ne.s32.totalorder %s168, %s170
      %p174 = scmp.eq.s32.totalorder %s24, 0
      %p175 = por %p173, %p174
      %p176 = scmp.ne.s32.totalorder %s168, %s170
      %p177 = scmp.eq.s32.totalorder %s29, 1
      %p178 = por %p176, %p177
      %p179 = scmp.ne.s32.totalorder %s170, %s171
      %p180 = scmp.eq.s32.totalorder %s29, 0
      %p181 = por %p179, %p180
      %p182 = scmp.ne.s32.totalorder %s170, %s171
      %p183 = scmp.eq.s32.totalorder %s30, 1
      %p184 = por %p182, %p183
      %p186 = scmp.ne.s32.totalorder %s171, %s185
      %p187 = scmp.eq.s32.totalorder %s30, 0
      %p188 = por %p186, %p187
      %s190 = sadd.s32 %s189, 1
      %p193 = scmp.eq.s32.totalorder %s24, 1
      %p194 = scmp.ne.s32.totalorder %s189, %s191
      %p195 = scmp.eq.s32.totalorder %s24, 0
      %p196 = por %p194, %p195
      %p197 = scmp.ne.s32.totalorder %s189, %s191
      %p198 = scmp.eq.s32.totalorder %s29, 1
      %p199 = por %p197, %p198
      %p200 = scmp.ne.s32.totalorder %s191, %s192
      %p201 = scmp.eq.s32.totalorder %s29, 0
      %p202 = por %p200, %p201
      %p203 = scmp.ne.s32.totalorder %s191, %s192
      %p204 = scmp.eq.s32.totalorder %s30, 1
      %p205 = por %p203, %p204
      %p207 = scmp.ne.s32.totalorder %s192, %s206
      %p208 = scmp.eq.s32.totalorder %s30, 0
      %p209 = por %p207, %p208
      %s210 = ssub.s32 %s24, %s31
      %p211 = scmp.eq.s32.totalorder %s210, 0
      %s213 = sadd.s32 %s212, 1
      %s214 = scalar_select %p211, %s212, %s213
      %p217 = pneg %p211
      %p218 = scmp.eq.s32.totalorder %s24, 1
      %p219 = por %p217, %p218
      %p220 = scmp.ne.s32.totalorder %s212, %s215
      %p221 = scmp.eq.s32.totalorder %s24, 0
      %p222 = por %p220, %p221
      %p223 = scmp.ne.s32.totalorder %s212, %s215
      %p224 = scmp.eq.s32.totalorder %s29, 1
      %p225 = por %p223, %p224
      %p226 = scmp.ne.s32.totalorder %s215, %s216
      %p227 = scmp.eq.s32.totalorder %s29, 0
      %p228 = por %p226, %p227
      %p229 = scmp.ne.s32.totalorder %s215, %s216
      %p230 = scmp.eq.s32.totalorder %s30, 1
      %p231 = por %p229, %p230
      %p233 = scmp.ne.s32.totalorder %s216, %s232
      %p234 = scmp.eq.s32.totalorder %s30, 0
      %p235 = por %p233, %p234
      %p236 = scmp.le.s32.totalorder 1, %s24
      %p237 = scmp.lt.s32.totalorder %s24, 3
      %p238 = pnand %p236, %p237
      %p239 = pneg %p238
      // Predicated region
      $region9: #{tpu_custom_call.1} parent=5 // pred_check
        _
      $region10: #{tpu_custom_call.1} parent=5 // pred_check_branch
        %241 = sbr.rel (%p238) target = $region12
      $region11: #{tpu_custom_call.1} parent=5 // pred_region
        %s242 = ssub.s32 %s24, 1
        // Predicated region
        $region13: #{tpu_custom_call.1} parent=11 // pred_check
          %p243 = pneg %p97
        $region14: #{tpu_custom_call.1} parent=11 // pred_check_branch
          %245 = sbr.rel (%p243) target = $region16
        $region15: #{tpu_custom_call.1} parent=11 // pred_region
          _
        $region16: #{tpu_custom_call.1} parent=11 // pred_fallthru
          _
        // Predicated region
        $region17: #{tpu_custom_call.1} parent=11 // pred_check
          %p246 = pneg %p118
        $region18: #{tpu_custom_call.1} parent=11 // pred_check_branch
          %248 = sbr.rel (%p246) target = $region20
        $region19: #{tpu_custom_call.1} parent=11 // pred_region
          _
        $region20: #{tpu_custom_call.1} parent=11 // pred_fallthru
          _
        // Predicated region
        $region21: #{tpu_custom_call.1} parent=11 // pred_check
          %p249 = pneg %p139
        $region22: #{tpu_custom_call.1} parent=11 // pred_check_branch
          %251 = sbr.rel (%p249) target = $region24
        $region23: #{tpu_custom_call.1} parent=11 // pred_region
          _
        $region24: #{tpu_custom_call.1} parent=11 // pred_fallthru
          _
        // Predicated region
        $region25: #{tpu_custom_call.1} parent=11 // pred_check
          %p252 = pneg %p160
        $region26: #{tpu_custom_call.1} parent=11 // pred_check_branch
          %254 = sbr.rel (%p252) target = $region28
        $region27: #{tpu_custom_call.1} parent=11 // pred_region
          _
        $region28: #{tpu_custom_call.1} parent=11 // pred_fallthru
          _
        // Predicated region
        $region29: #{tpu_custom_call.1} parent=11 // pred_check
          %p255 = pneg %p181
        $region30: #{tpu_custom_call.1} parent=11 // pred_check_branch
          %257 = sbr.rel (%p255) target = $region32
        $region31: #{tpu_custom_call.1} parent=11 // pred_region
          %259 = vsyncadd [#allocation6], 0
          %s260 = sshll.u32 %s6, 4
          %s261 = int_to_ptr.hbm [resolvable:$true] %s260
          %s262 = sshll.u32 [#allocation7], 4
          %s263 = int_to_ptr.vmem [resolvable:$true] %s262
          %268 = dma.hbm_to_vmem [thread:$0]  %s261, 256, %s263, [#allocation6], 64, 64, 4
        $region32: #{tpu_custom_call.1} parent=11 // pred_fallthru
          _
        // Predicated region
        $region33: #{tpu_custom_call.1} parent=11 // pred_check
          %p269 = pneg %p202
        $region34: #{tpu_custom_call.1} parent=11 // pred_check_branch
          %271 = sbr.rel (%p269) target = $region36
        $region35: #{tpu_custom_call.1} parent=11 // pred_region
          %273 = vsyncadd [#allocation9], 0
          %s274 = sshll.u32 %s7, 4
          %s275 = int_to_ptr.hbm [resolvable:$true] %s274
          %s276 = sshll.u32 [#allocation8], 4
          %s277 = int_to_ptr.vmem [resolvable:$true] %s276
          %282 = dma.hbm_to_vmem [thread:$0]  %s275, 384, %s277, [#allocation9], 128, 128, 8
        $region36: #{tpu_custom_call.1} parent=11 // pred_fallthru
          _
      $region12: #{tpu_custom_call.1} parent=5 // pred_fallthru
        _
      %p283 = scmp.lt.s32.totalorder %s24, 2
      // Predicated region
      $region37: #{tpu_custom_call.1} parent=5 // pred_check
        %p284 = pneg %p283
      $region38: #{tpu_custom_call.1} parent=5 // pred_check_branch
        %286 = sbr.rel (%p284) target = $region40
      $region39: #{tpu_custom_call.1} parent=5 // pred_region
        // Predicated region
        $region41: #{tpu_custom_call.1} parent=39 // pred_check
          %p287 = pneg %p44
        $region42: #{tpu_custom_call.1} parent=39 // pred_check_branch
          %289 = sbr.rel (%p287) target = $region44
        $region43: #{tpu_custom_call.1} parent=39 // pred_region
          %s290 = sand.u32 %s34, 1
          %s291 = scalar_lea.sflag [#allocation3], %s290
          %s292 = sand.u32 %s34, 1
          %s293 = smul.addr %s292, 8
          %s294 = scalar_lea.vmem [#allocation2], %s293
          %296 = vsyncadd %s291, 0
          %s297 = smul.addr %s24, 8
          %s298 = scalar_lea.hbm %s0, %s297
          %s300 = sshll.u32 %s298, 4
          %s301 = int_to_ptr.hbm [resolvable:$true] %s300
          %s302 = sshll.u32 %s294, 4
          %s303 = int_to_ptr.vmem [resolvable:$true] %s302
          %305 = dma.hbm_to_vmem [thread:$0]  %s301, 128, %s303, %s291
        $region44: #{tpu_custom_call.1} parent=39 // pred_fallthru
          _
        // Predicated region
        $region45: #{tpu_custom_call.1} parent=39 // pred_check
          %p306 = pneg %p70
        $region46: #{tpu_custom_call.1} parent=39 // pred_check_branch
          %308 = sbr.rel (%p306) target = $region48
        $region47: #{tpu_custom_call.1} parent=39 // pred_region
          %s309 = sand.u32 %s24, 1
          %s310 = scalar_lea.sflag [#allocation6], %s309
          %s311 = sand.u32 %s60, 1
          %s312 = scalar_lea.vmem [#allocation5], %s311
          %314 = vsyncadd %s310, 0
          %s315 = scalar_lea.hbm %s1, %s24
          %s317 = sshll.u32 %s315, 4
          %s318 = int_to_ptr.hbm [resolvable:$true] %s317
          %s319 = sshll.u32 %s312, 4
          %s320 = int_to_ptr.vmem [resolvable:$true] %s319
          %322 = dma.hbm_to_vmem [thread:$0]  %s318, 16, %s320, %s310
        $region48: #{tpu_custom_call.1} parent=39 // pred_fallthru
          _
      $region40: #{tpu_custom_call.1} parent=5 // pred_fallthru
        _
      %p323 = scmp.le.s32.totalorder 1, %s24
      %p324 = scmp.lt.s32.totalorder %s24, 3
      %p325 = pnand %p323, %p324
      %p326 = pneg %p325
      // Predicated region
      $region49: #{tpu_custom_call.1} parent=5 // pred_check
        _
      $region50: #{tpu_custom_call.1} parent=5 // pred_check_branch
        %328 = sbr.rel (%p325) target = $region52
      $region51: #{tpu_custom_call.1} parent=5 // pred_region
        %s329 = ssub.s32 %s24, 1
        %s330 = sand.u32 %s37, 1
        %s331 = scalar_lea.sflag [#allocation3], %s330
        %s332 = sand.u32 %s37, 1
        %s333 = smul.addr %s332, 8
        %s334 = scalar_lea.vmem [#allocation2], %s333
        // Predicated region
        $region53: #{tpu_custom_call.1} parent=51 // pred_check
          %p335 = pneg %p50
        $region54: #{tpu_custom_call.1} parent=51 // pred_check_branch
          %337 = sbr.rel (%p335) target = $region56
        $region55: #{tpu_custom_call.1} parent=51 // pred_region
          %339 = dma.done %s331, 128
        $region56: #{tpu_custom_call.1} parent=51 // pred_fallthru
          _
        %s340 = sand.u32 %s29, 1
        %s341 = scalar_lea.sflag [#allocation6], %s340
        %s342 = sand.u32 %s63, 1
        %s343 = scalar_lea.vmem [#allocation5], %s342
        // Predicated region
        $region57: #{tpu_custom_call.1} parent=51 // pred_check
          %p344 = pneg %p76
        $region58: #{tpu_custom_call.1} parent=51 // pred_check_branch
          %346 = sbr.rel (%p344) target = $region60
        $region59: #{tpu_custom_call.1} parent=51 // pred_region
          %348 = dma.done %s341, 16
        $region60: #{tpu_custom_call.1} parent=51 // pred_fallthru
          _
        // Predicated region
        $region61: #{tpu_custom_call.1} parent=51 // pred_check
          %p349 = pneg %p181
        $region62: #{tpu_custom_call.1} parent=51 // pred_check_branch
          %351 = sbr.rel (%p349) target = $region64
        $region63: #{tpu_custom_call.1} parent=51 // pred_region
          %353 = dma.done [#allocation6], 256
        $region64: #{tpu_custom_call.1} parent=51 // pred_fallthru
          _
        // Predicated region
        $region65: #{tpu_custom_call.1} parent=51 // pred_check
          %p354 = pneg %p202
        $region66: #{tpu_custom_call.1} parent=51 // pred_check_branch
          %356 = sbr.rel (%p354) target = $region68
        $region67: #{tpu_custom_call.1} parent=51 // pred_region
          %358 = dma.done [#allocation9], 384
        $region68: #{tpu_custom_call.1} parent=51 // pred_fallthru
          _
        %s359 = sand.u32 %s37, 1
        %s360 = scalar_lea.sflag [#allocation3], %s359
        %s361 = sand.u32 %s37, 1
        %s362 = smul.addr %s361, 8
        %s363 = scalar_lea.vmem [#allocation2], %s362
        %p364 = pneg %p50
        %p365 = pneg %p47
        %s366 = sand.u32 %s29, 1
        %s367 = scalar_lea.sflag [#allocation6], %s366
        %s368 = sand.u32 %s63, 1
        %s369 = scalar_lea.vmem [#allocation5], %s368
        %p370 = pneg %p76
        %p371 = pneg %p73
        %p372 = pneg %p97
        %p373 = pneg %p94
        %p374 = pneg %p118
        %p375 = pneg %p115
        %p376 = pneg %p139
        %p377 = pneg %p136
        %p378 = pneg %p160
        %p379 = pneg %p157
        %p380 = pneg %p181
        %p381 = pneg %p178
        %p382 = pneg %p202
        %p383 = pneg %p199
        %p384 = pneg %p228
        %p385 = pneg %p225
        %s386 = sand.u32 %s215, 1
        %s387 = scalar_lea.sflag [#allocation4], %s386
        %s388 = sand.u32 %s215, 1
        %s389 = smul.addr %s388, 8
        %s390 = scalar_lea.vmem [#allocation10], %s389
        %v392 = vld [vmem:[%s334] sm:$0xff]
        %v393 = vld [vmem:[#allocation8] sm:$0x1]
        %v394 = vld [vmem:[#allocation8 + $0x1] sm:$0x1]
        %vm395 = vcmask 261120
        %v396 = vsel %vm395, %v392, 0.0
        %397 = vadd.xlane.f32.xlu0 %v396
        %v398 = vpop.xlane.xlu0 %397
        %v399 = vrcp.pop 32.0
        %v400 = vmul.f32 32.0, %v399
        %v401 = vsub.f32 1.0, %v400
        %v402 = vmul.f32 %v399, %v401
        %v403 = vadd.f32 %v399, %v402
        %vm404 = vweird.f32 %v399
        %v405 = vsel %vm404, %v399, %v403
        %v406 = vmul.f32 %v398, %v405
        %v407 = vsub.f32 %v392, %v406
        %v408 = vmul.f32 %v407, %v407
        %v409 = vsel %vm395, %v408, 0.0
        %410 = vadd.xlane.f32.xlu0 %v409
        %v411 = vpop.xlane.xlu0 %410
        %v412 = vmul.f32 %v411, %v405
        %v413 = vadd.f32 %v412, 1e-12
        %v414 = vrsqrt.pop %v413
        %v415 = vmul.f32 %v414, %v413
        %v416 = vmul.f32 %v415, %v414
        %v417 = vmul.f32 0.5, %v416
        %v418 = vsub.f32 1.5, %v417
        %v419 = vmul.f32 %v414, %v418
        %vm420 = vweird.f32 %v413
        %vm421 = vweird.f32 %v414
        %vm422 = vmor %vm420, %vm421
        %v423 = vsel %vm422, %v414, %v419
        %v424 = vmul.f32 %v407, %v423
        %v425 = vperm.slane %v393, 0
        %v426 = vmul.f32 %v424, %v425
        %v427 = vperm.slane %v394, 0
        %v428 = vadd.f32 %v426, %v427
        %v429 = vld [vmem:[%s343] sm:$0x1]
        %v430 = vld [vmem:[%s2] sm:$0xf]
        %v431 = vld [vmem:[%s2 + $0x4] sm:$0xf]
        %v432 = vld [vmem:[%s2 + $0x8] sm:$0xf]
        %v433 = vld [vmem:[%s2 + $0xc] sm:$0xf]
        %v434 = vld [vmem:[%s3] sm:$0xf]
        %v435 = vld [vmem:[%s3 + $0x4] sm:$0xf]
        %v436 = vld [vmem:[%s3 + $0x8] sm:$0xf]
        %v437 = vld [vmem:[%s3 + $0xc] sm:$0xf]
        %v438 = vpack.c.bf16 %v428, %v428
        %v439 = vld [vmem:[#allocation8 + $0x2] sm:$0x1]
        %v440 = vperm.slane %v439, 0
        %v445 = vunpack.c.l.b16 %v430
        %v446 = vunpack.c.l.b16 %v431
        %v447 = vunpack.c.l.b16 %v432
        %v448 = vunpack.c.l.b16 %v433
        %v449 = vpack.c.b16 %v446, %v445
        %v450 = vpack.c.b16 %v448, %v447
        %v454 = vsel %vm395, %v438, 0
        %456 = vmatpush.bf16.msra.mxu0 0
        %457 = vmatpush.bf16.msra.mxu0 0
        %458 = vmatpush.bf16.msra.mxu0 0
        %459 = vmatpush.bf16.msra.mxu0 0
        %460 = vmatpush.bf16.msra.mxu0 0
        %461 = vmatpush.bf16.msra.mxu0 0
        %462 = vmatpush.bf16.msra.mxu0 %v450
        %463 = vmatpush.bf16.msra.mxu0 %v449
        %464 = vmatmul.bf16.gmra.mxu0 %v454
        %v465 = vpop.f32.mrf.mxu0
        %v466 = vadd.f32 %v440, %v465
        %v467 = vpop.f32.mrf.mxu0
        %468 = vdwg.mxu0
        %v469 = vpack.c.bf16 %v466, %v466
        %471 = vrot.lane.b32.xlu0 %v469, 96
        %v472 = vpop.permute.xlu0 %471
        %vm473 = vcmask 130048
        %v475 = vsel %vm473, %v469, 0
        %v478 = vsel %vm473, %v472, 0
        %480 = vmatpush.bf16.xpose.msra.mxu0 0
        %481 = vmatpush.bf16.xpose.msra.mxu0 0
        %482 = vmatpush.bf16.xpose.msra.mxu0 0
        %483 = vmatpush.bf16.xpose.msra.mxu0 0
        %484 = vmatpush.bf16.xpose.msra.mxu0 0
        %485 = vmatpush.bf16.xpose.msra.mxu0 0
        %486 = vmatpush.bf16.xpose.msra.mxu0 0
        %487 = vmatpush.bf16.xpose.msra.mxu0 %v478
        %488 = vmatmul.bf16.gmra.mxu0 %v475
        %v489 = vpop.f32.mrf.mxu0
        %v490 = vadd.f32 0.0, %v489
        %v491 = vpop.f32.mrf.mxu0
        %492 = vdwg.mxu0
        %v493 = vmul.f32 %v490, 0.25
        %v495 = vperm.slane %v429, 0
        %v497 = vadd.f32 %v493, %v495
        %vm498 = vcmask 64512
        %v499 = vsel %vm498, %v497, -inf
        %500 = vmax.xlane.f32.xlu0 %v499
        %v501 = vpop.xlane.xlu0 %500
        %v502 = vsub.f32 %v497, %v501
        %v503 = vmul.f32 %v502, 1.442695
        %v504 = vpow.pop %v503
        %v505 = vsel %vm498, %v504, 0.0
        %506 = vadd.xlane.f32.xlu0 %v505
        %v507 = vpop.xlane.xlu0 %506
        %v508 = vrcp.pop %v507
        %v509 = vmul.f32 %v507, %v508
        %v510 = vsub.f32 1.0, %v509
        %v511 = vmul.f32 %v508, %v510
        %v512 = vadd.f32 %v508, %v511
        %vm513 = vweird.f32 %v507
        %vm514 = vweird.f32 %v508
        %vm515 = vmor %vm513, %vm514
        %v516 = vsel %vm515, %v508, %v512
        %v517 = vand.u32 2147483647, %v507
        %vm518 = vcmp.eq.f32.partialorder %v517, 8.507059e+37
        %v519 = vand.u32 %v507, 2147483648
        %v520 = vor.u32 1.1754944e-38, %v519
        %v521 = vsel %vm518, %v520, %v516
        %v522 = vmul.f32 %v504, %v521
        %v523 = vpack.c.bf16 %v522, %v522
        %524 = vrot.lane.b32.xlu0 %v469, 64
        %v525 = vpop.permute.xlu0 %524
        %v527 = vsel %vm498, %v523, 0
        %vm529 = vcmask 1043456
        %v531 = vsel %vm529, %v525, 0
        %533 = vmatpush.bf16.msra.mxu0 0
        %534 = vmatpush.bf16.msra.mxu0 0
        %535 = vmatpush.bf16.msra.mxu0 0
        %536 = vmatpush.bf16.msra.mxu0 0
        %537 = vmatpush.bf16.msra.mxu0 0
        %538 = vmatpush.bf16.msra.mxu0 0
        %539 = vmatpush.bf16.msra.mxu0 0
        %540 = vmatpush.bf16.msra.mxu0 %v531
        %541 = vmatmul.bf16.gmra.mxu0 %v527
        %v542 = vpop.f32.mrf.mxu0
        %v543 = vadd.f32 0.0, %v542
        %v544 = vpop.f32.mrf.mxu0
        %545 = vdwg.mxu0
        %v546 = vpack.c.bf16 %v543, %v543
        %547 = vrot.lane.b32.xlu0 %v469, 112
        %v548 = vpop.permute.xlu0 %547
        %549 = vrot.lane.b32.xlu0 %v469, 80
        %v550 = vpop.permute.xlu0 %549
        %v552 = vsel %vm473, %v548, 0
        %v555 = vsel %vm473, %v550, 0
        %557 = vmatpush.bf16.xpose.msra.mxu0 0
        %558 = vmatpush.bf16.xpose.msra.mxu0 0
        %559 = vmatpush.bf16.xpose.msra.mxu0 0
        %560 = vmatpush.bf16.xpose.msra.mxu0 0
        %561 = vmatpush.bf16.xpose.msra.mxu0 0
        %562 = vmatpush.bf16.xpose.msra.mxu0 0
        %563 = vmatpush.bf16.xpose.msra.mxu0 0
        %564 = vmatpush.bf16.xpose.msra.mxu0 %v555
        %565 = vmatmul.bf16.gmra.mxu0 %v552
        %v566 = vpop.f32.mrf.mxu0
        %v567 = vadd.f32 0.0, %v566
        %v568 = vpop.f32.mrf.mxu0
        %569 = vdwg.mxu0
        %v570 = vmul.f32 %v567, 0.25
        %v571 = vadd.f32 %v570, %v495
        %v572 = vsel %vm498, %v571, -inf
        %573 = vmax.xlane.f32.xlu0 %v572
        %v574 = vpop.xlane.xlu0 %573
        %v575 = vsub.f32 %v571, %v574
        %v576 = vmul.f32 %v575, 1.442695
        %v577 = vpow.pop %v576
        %v578 = vsel %vm498, %v577, 0.0
        %579 = vadd.xlane.f32.xlu0 %v578
        %v580 = vpop.xlane.xlu0 %579
        %v581 = vrcp.pop %v580
        %v582 = vmul.f32 %v580, %v581
        %v583 = vsub.f32 1.0, %v582
        %v584 = vmul.f32 %v581, %v583
        %v585 = vadd.f32 %v581, %v584
        %vm586 = vweird.f32 %v580
        %vm587 = vweird.f32 %v581
        %vm588 = vmor %vm586, %vm587
        %v589 = vsel %vm588, %v581, %v585
        %v590 = vand.u32 2147483647, %v580
        %vm591 = vcmp.eq.f32.partialorder %v590, 8.507059e+37
        %v592 = vand.u32 %v580, 2147483648
        %v593 = vor.u32 1.1754944e-38, %v592
        %v594 = vsel %vm591, %v593, %v589
        %v595 = vmul.f32 %v577, %v594
        %v596 = vpack.c.bf16 %v595, %v595
        %597 = vrot.lane.b32.xlu0 %v469, 48
        %v598 = vpop.permute.xlu0 %597
        %v600 = vsel %vm498, %v596, 0
        %v603 = vsel %vm529, %v598, 0
        %605 = vmatpush.bf16.msra.mxu0 0
        %606 = vmatpush.bf16.msra.mxu0 0
        %607 = vmatpush.bf16.msra.mxu0 0
        %608 = vmatpush.bf16.msra.mxu0 0
        %609 = vmatpush.bf16.msra.mxu0 0
        %610 = vmatpush.bf16.msra.mxu0 0
        %611 = vmatpush.bf16.msra.mxu0 0
        %612 = vmatpush.bf16.msra.mxu0 %v603
        %613 = vmatmul.bf16.gmra.mxu0 %v600
        %v614 = vpop.f32.mrf.mxu0
        %v615 = vadd.f32 0.0, %v614
        %v616 = vpop.f32.mrf.mxu0
        %617 = vdwg.mxu0
        %v618 = vpack.c.bf16 %v615, %v615
        %v621 = vunpack.c.l.b16 %v436
        %v622 = vunpack.c.l.b16 %v437
        %v623 = vpack.c.b16 %v622, %v621
        %v626 = vsel %vm473, %v618, 0
        %628 = vmatpush.bf16.msra.mxu0 0
        %629 = vmatpush.bf16.msra.mxu0 0
        %630 = vmatpush.bf16.msra.mxu0 0
        %631 = vmatpush.bf16.msra.mxu0 0
        %632 = vmatpush.bf16.msra.mxu0 0
        %633 = vmatpush.bf16.msra.mxu0 0
        %634 = vmatpush.bf16.msra.mxu0 0
        %635 = vmatpush.bf16.msra.mxu0 %v623
        %636 = vmatmul.bf16.gmra.mxu0 %v626
        %v637 = vpop.f32.mrf.mxu0
        %v638 = vadd.f32 0.0, %v637
        %v639 = vpop.f32.mrf.mxu0
        %640 = vdwg.mxu0
        %v643 = vunpack.c.l.b16 %v434
        %v644 = vunpack.c.l.b16 %v435
        %v645 = vpack.c.b16 %v644, %v643
        %v648 = vsel %vm473, %v546, 0
        %650 = vmatpush.bf16.msra.mxu0 0
        %651 = vmatpush.bf16.msra.mxu0 0
        %652 = vmatpush.bf16.msra.mxu0 0
        %653 = vmatpush.bf16.msra.mxu0 0
        %654 = vmatpush.bf16.msra.mxu0 0
        %655 = vmatpush.bf16.msra.mxu0 0
        %656 = vmatpush.bf16.msra.mxu0 0
        %657 = vmatpush.bf16.msra.mxu0 %v645
        %658 = vmatmul.bf16.gmra.mxu0 %v648
        %v659 = vpop.f32.mrf.mxu0
        %v660 = vadd.f32 %v638, %v659
        %v661 = vpop.f32.mrf.mxu0
        %662 = vdwg.mxu0
        %v663 = vld [vmem:[#allocation8 + $0x3] sm:$0x1]
        %v664 = vperm.slane %v663, 0
        %v665 = vadd.f32 %v660, %v664
        %v666 = vadd.f32 %v665, %v428
        %v667 = vld [vmem:[#allocation8 + $0x4] sm:$0x1]
        %v668 = vld [vmem:[#allocation8 + $0x5] sm:$0x1]
        %v669 = vsel %vm395, %v666, 0.0
        %670 = vadd.xlane.f32.xlu0 %v669
        %v671 = vpop.xlane.xlu0 %670
        %v672 = vmul.f32 %v671, %v405
        %v673 = vsub.f32 %v666, %v672
        %v674 = vmul.f32 %v673, %v673
        %v675 = vsel %vm395, %v674, 0.0
        %676 = vadd.xlane.f32.xlu0 %v675
        %v677 = vpop.xlane.xlu0 %676
        %v678 = vmul.f32 %v677, %v405
        %v679 = vadd.f32 %v678, 1e-12
        %v680 = vrsqrt.pop %v679
        %v681 = vmul.f32 %v680, %v679
        %v682 = vmul.f32 %v681, %v680
        %v683 = vmul.f32 0.5, %v682
        %v684 = vsub.f32 1.5, %v683
        %v685 = vmul.f32 %v680, %v684
        %vm686 = vweird.f32 %v679
        %vm687 = vweird.f32 %v680
        %vm688 = vmor %vm686, %vm687
        %v689 = vsel %vm688, %v680, %v685
        %v690 = vmul.f32 %v673, %v689
        %v691 = vperm.slane %v667, 0
        %v692 = vmul.f32 %v690, %v691
        %v693 = vperm.slane %v668, 0
        %v694 = vadd.f32 %v692, %v693
        %v695 = vpack.c.bf16 %v694, %v694
        %v696 = vld [vmem:[%s4] sm:$0xf]
        %v697 = vld [vmem:[%s4 + $0x4] sm:$0xf]
        %v698 = vld [vmem:[%s4 + $0x8] sm:$0xf]
        %v699 = vld [vmem:[%s4 + $0xc] sm:$0xf]
        %v700 = vld [vmem:[#allocation8 + $0x6] sm:$0x1]
        %v701 = vperm.slane %v700, 0
        %v706 = vunpack.c.l.b16 %v696
        %v707 = vunpack.c.l.b16 %v697
        %v708 = vunpack.c.l.b16 %v698
        %v709 = vunpack.c.l.b16 %v699
        %v710 = vpack.c.b16 %v707, %v706
        %v711 = vpack.c.b16 %v709, %v708
        %v715 = vsel %vm395, %v695, 0
        %717 = vmatpush.bf16.msra.mxu0 0
        %718 = vmatpush.bf16.msra.mxu0 0
        %719 = vmatpush.bf16.msra.mxu0 0
        %720 = vmatpush.bf16.msra.mxu0 0
        %721 = vmatpush.bf16.msra.mxu0 0
        %722 = vmatpush.bf16.msra.mxu0 0
        %723 = vmatpush.bf16.msra.mxu0 %v711
        %724 = vmatpush.bf16.msra.mxu0 %v710
        %725 = vmatmul.bf16.gmra.mxu0 %v715
        %v726 = vpop.f32.mrf.mxu0
        %v727 = vadd.f32 %v701, %v726
        %v728 = vpop.f32.mrf.mxu0
        %729 = vdwg.mxu0
        %v730 = vmul.f32 %v727, %v727
        %v731 = vmul.f32 %v727, %v730
        %v732 = vmul.f32 %v731, 0.044715
        %v733 = vadd.f32 %v727, %v732
        %v734 = vmul.f32 %v733, 0.7978846
        %v735 = vtanh.pop %v734
        %v736 = vadd.f32 %v735, 1.0
        %v737 = vmul.f32 %v736, 0.5
        %v738 = vmul.f32 %v727, %v737
        %v739 = vpack.c.bf16 %v738, %v738
        %v740 = vld [vmem:[%s5] sm:$0xf]
        %v741 = vld [vmem:[%s5 + $0x4] sm:$0xf]
        %v742 = vld [vmem:[%s5 + $0x8] sm:$0xf]
        %v743 = vld [vmem:[%s5 + $0xc] sm:$0xf]
        %v744 = vld [vmem:[%s5 + $0x10] sm:$0xf]
        %v745 = vld [vmem:[%s5 + $0x14] sm:$0xf]
        %v746 = vld [vmem:[%s5 + $0x18] sm:$0xf]
        %v747 = vld [vmem:[%s5 + $0x1c] sm:$0xf]
        %v748 = vld [vmem:[#allocation8 + $0x7] sm:$0x1]
        %v749 = vperm.slane %v748, 0
        %v758 = vunpack.c.l.b16 %v740
        %v759 = vunpack.c.l.b16 %v741
        %v760 = vunpack.c.l.b16 %v742
        %v761 = vunpack.c.l.b16 %v743
        %v762 = vunpack.c.l.b16 %v744
        %v763 = vunpack.c.l.b16 %v745
        %v764 = vunpack.c.l.b16 %v746
        %v765 = vunpack.c.l.b16 %v747
        %v766 = vpack.c.b16 %v759, %v758
        %v767 = vpack.c.b16 %v761, %v760
        %v768 = vpack.c.b16 %v763, %v762
        %v769 = vpack.c.b16 %v765, %v764
        %vm774 = vcmask 523264
        %v776 = vsel %vm774, %v739, 0
        %778 = vmatpush.bf16.msra.mxu0 0
        %779 = vmatpush.bf16.msra.mxu0 0
        %780 = vmatpush.bf16.msra.mxu0 0
        %781 = vmatpush.bf16.msra.mxu0 0
        %782 = vmatpush.bf16.msra.mxu0 %v769
        %783 = vmatpush.bf16.msra.mxu0 %v768
        %784 = vmatpush.bf16.msra.mxu0 %v767
        %785 = vmatpush.bf16.msra.mxu0 %v766
        %786 = vmatmul.bf16.gmra.mxu0 %v776
        %v787 = vpop.f32.mrf.mxu0
        %v788 = vadd.f32 %v749, %v787
        %v789 = vpop.f32.mrf.mxu0
        %790 = vdwg.mxu0
        %v791 = vadd.f32 %v788, %v694
        %v792 = vld [vmem:[#allocation8 + $0x8] sm:$0x1]
        %v793 = vld [vmem:[#allocation8 + $0x9] sm:$0x1]
        %v794 = vsel %vm395, %v791, 0.0
        %795 = vadd.xlane.f32.xlu0 %v794
        %v796 = vpop.xlane.xlu0 %795
        %v797 = vmul.f32 %v796, %v405
        %v798 = vsub.f32 %v791, %v797
        %v799 = vmul.f32 %v798, %v798
        %v800 = vsel %vm395, %v799, 0.0
        %801 = vadd.xlane.f32.xlu0 %v800
        %v802 = vpop.xlane.xlu0 %801
        %v803 = vmul.f32 %v802, %v405
        %v804 = vadd.f32 %v803, 1e-12
        %v805 = vrsqrt.pop %v804
        %v806 = vmul.f32 %v805, %v804
        %v807 = vmul.f32 %v806, %v805
        %v808 = vmul.f32 0.5, %v807
        %v809 = vsub.f32 1.5, %v808
        %v810 = vmul.f32 %v805, %v809
        %vm811 = vweird.f32 %v804
        %vm812 = vweird.f32 %v805
        %vm813 = vmor %vm811, %vm812
        %v814 = vsel %vm813, %v805, %v810
        %v815 = vmul.f32 %v798, %v814
        %v816 = vperm.slane %v792, 0
        %v817 = vmul.f32 %v815, %v816
        %v818 = vperm.slane %v793, 0
        %v819 = vadd.f32 %v817, %v818
        %s820 = scalar_lea.vmem %s2, 16
        %v821 = vld [vmem:[%s820] sm:$0xf]
        %v822 = vld [vmem:[%s820 + $0x4] sm:$0xf]
        %v823 = vld [vmem:[%s820 + $0x8] sm:$0xf]
        %v824 = vld [vmem:[%s820 + $0xc] sm:$0xf]
        %s825 = scalar_lea.vmem %s3, 16
        %v826 = vld [vmem:[%s825] sm:$0xf]
        %v827 = vld [vmem:[%s825 + $0x4] sm:$0xf]
        %v828 = vld [vmem:[%s825 + $0x8] sm:$0xf]
        %v829 = vld [vmem:[%s825 + $0xc] sm:$0xf]
        %v830 = vpack.c.bf16 %v819, %v819
        %v831 = vld [vmem:[#allocation8 + $0xa] sm:$0x1]
        %v832 = vperm.slane %v831, 0
        %v837 = vunpack.c.l.b16 %v821
        %v838 = vunpack.c.l.b16 %v822
        %v839 = vunpack.c.l.b16 %v823
        %v840 = vunpack.c.l.b16 %v824
        %v841 = vpack.c.b16 %v838, %v837
        %v842 = vpack.c.b16 %v840, %v839
        %v846 = vsel %vm395, %v830, 0
        %848 = vmatpush.bf16.msra.mxu0 0
        %849 = vmatpush.bf16.msra.mxu0 0
        %850 = vmatpush.bf16.msra.mxu0 0
        %851 = vmatpush.bf16.msra.mxu0 0
        %852 = vmatpush.bf16.msra.mxu0 0
        %853 = vmatpush.bf16.msra.mxu0 0
        %854 = vmatpush.bf16.msra.mxu0 %v842
        %855 = vmatpush.bf16.msra.mxu0 %v841
        %856 = vmatmul.bf16.gmra.mxu0 %v846
        %v857 = vpop.f32.mrf.mxu0
        %v858 = vadd.f32 %v832, %v857
        %v859 = vpop.f32.mrf.mxu0
        %860 = vdwg.mxu0
        %v861 = vpack.c.bf16 %v858, %v858
        %863 = vrot.lane.b32.xlu0 %v861, 96
        %v864 = vpop.permute.xlu0 %863
        %v866 = vsel %vm473, %v861, 0
        %v869 = vsel %vm473, %v864, 0
        %871 = vmatpush.bf16.xpose.msra.mxu0 0
        %872 = vmatpush.bf16.xpose.msra.mxu0 0
        %873 = vmatpush.bf16.xpose.msra.mxu0 0
        %874 = vmatpush.bf16.xpose.msra.mxu0 0
        %875 = vmatpush.bf16.xpose.msra.mxu0 0
        %876 = vmatpush.bf16.xpose.msra.mxu0 0
        %877 = vmatpush.bf16.xpose.msra.mxu0 0
        %878 = vmatpush.bf16.xpose.msra.mxu0 %v869
        %879 = vmatmul.bf16.gmra.mxu0 %v866
        %v880 = vpop.f32.mrf.mxu0
        %v881 = vadd.f32 0.0, %v880
        %v882 = vpop.f32.mrf.mxu0
        %883 = vdwg.mxu0
        %v884 = vmul.f32 %v881, 0.25
        %v885 = vadd.f32 %v884, %v495
        %v886 = vsel %vm498, %v885, -inf
        %887 = vmax.xlane.f32.xlu0 %v886
        %v888 = vpop.xlane.xlu0 %887
        %v889 = vsub.f32 %v885, %v888
        %v890 = vmul.f32 %v889, 1.442695
        %v891 = vpow.pop %v890
        %v892 = vsel %vm498, %v891, 0.0
        %893 = vadd.xlane.f32.xlu0 %v892
        %v894 = vpop.xlane.xlu0 %893
        %v895 = vrcp.pop %v894
        %v896 = vmul.f32 %v894, %v895
        %v897 = vsub.f32 1.0, %v896
        %v898 = vmul.f32 %v895, %v897
        %v899 = vadd.f32 %v895, %v898
        %vm900 = vweird.f32 %v894
        %vm901 = vweird.f32 %v895
        %vm902 = vmor %vm900, %vm901
        %v903 = vsel %vm902, %v895, %v899
        %v904 = vand.u32 2147483647, %v894
        %vm905 = vcmp.eq.f32.partialorder %v904, 8.507059e+37
        %v906 = vand.u32 %v894, 2147483648
        %v907 = vor.u32 1.1754944e-38, %v906
        %v908 = vsel %vm905, %v907, %v903
        %v909 = vmul.f32 %v891, %v908
        %v910 = vpack.c.bf16 %v909, %v909
        %911 = vrot.lane.b32.xlu0 %v861, 64
        %v912 = vpop.permute.xlu0 %911
        %v914 = vsel %vm498, %v910, 0
        %v917 = vsel %vm529, %v912, 0
        %919 = vmatpush.bf16.msra.mxu0 0
        %920 = vmatpush.bf16.msra.mxu0 0
        %921 = vmatpush.bf16.msra.mxu0 0
        %922 = vmatpush.bf16.msra.mxu0 0
        %923 = vmatpush.bf16.msra.mxu0 0
        %924 = vmatpush.bf16.msra.mxu0 0
        %925 = vmatpush.bf16.msra.mxu0 0
        %926 = vmatpush.bf16.msra.mxu0 %v917
        %927 = vmatmul.bf16.gmra.mxu0 %v914
        %v928 = vpop.f32.mrf.mxu0
        %v929 = vadd.f32 0.0, %v928
        %v930 = vpop.f32.mrf.mxu0
        %931 = vdwg.mxu0
        %v932 = vpack.c.bf16 %v929, %v929
        %933 = vrot.lane.b32.xlu0 %v861, 112
        %v934 = vpop.permute.xlu0 %933
        %935 = vrot.lane.b32.xlu0 %v861, 80
        %v936 = vpop.permute.xlu0 %935
        %v938 = vsel %vm473, %v934, 0
        %v941 = vsel %vm473, %v936, 0
        %943 = vmatpush.bf16.xpose.msra.mxu0 0
        %944 = vmatpush.bf16.xpose.msra.mxu0 0
        %945 = vmatpush.bf16.xpose.msra.mxu0 0
        %946 = vmatpush.bf16.xpose.msra.mxu0 0
        %947 = vmatpush.bf16.xpose.msra.mxu0 0
        %948 = vmatpush.bf16.xpose.msra.mxu0 0
        %949 = vmatpush.bf16.xpose.msra.mxu0 0
        %950 = vmatpush.bf16.xpose.msra.mxu0 %v941
        %951 = vmatmul.bf16.gmra.mxu0 %v938
        %v952 = vpop.f32.mrf.mxu0
        %v953 = vadd.f32 0.0, %v952
        %v954 = vpop.f32.mrf.mxu0
        %955 = vdwg.mxu0
        %v956 = vmul.f32 %v953, 0.25
        %v957 = vadd.f32 %v956, %v495
        %v958 = vsel %vm498, %v957, -inf
        %959 = vmax.xlane.f32.xlu0 %v958
        %v960 = vpop.xlane.xlu0 %959
        %v961 = vsub.f32 %v957, %v960
        %v962 = vmul.f32 %v961, 1.442695
        %v963 = vpow.pop %v962
        %v964 = vsel %vm498, %v963, 0.0
        %965 = vadd.xlane.f32.xlu0 %v964
        %v966 = vpop.xlane.xlu0 %965
        %v967 = vrcp.pop %v966
        %v968 = vmul.f32 %v966, %v967
        %v969 = vsub.f32 1.0, %v968
        %v970 = vmul.f32 %v967, %v969
        %v971 = vadd.f32 %v967, %v970
        %vm972 = vweird.f32 %v966
        %vm973 = vweird.f32 %v967
        %vm974 = vmor %vm972, %vm973
        %v975 = vsel %vm974, %v967, %v971
        %v976 = vand.u32 2147483647, %v966
        %vm977 = vcmp.eq.f32.partialorder %v976, 8.507059e+37
        %v978 = vand.u32 %v966, 2147483648
        %v979 = vor.u32 1.1754944e-38, %v978
        %v980 = vsel %vm977, %v979, %v975
        %v981 = vmul.f32 %v963, %v980
        %v982 = vpack.c.bf16 %v981, %v981
        %983 = vrot.lane.b32.xlu0 %v861, 48
        %v984 = vpop.permute.xlu0 %983
        %v986 = vsel %vm498, %v982, 0
        %v989 = vsel %vm529, %v984, 0
        %991 = vmatpush.bf16.msra.mxu0 0
        %992 = vmatpush.bf16.msra.mxu0 0
        %993 = vmatpush.bf16.msra.mxu0 0
        %994 = vmatpush.bf16.msra.mxu0 0
        %995 = vmatpush.bf16.msra.mxu0 0
        %996 = vmatpush.bf16.msra.mxu0 0
        %997 = vmatpush.bf16.msra.mxu0 0
        %998 = vmatpush.bf16.msra.mxu0 %v989
        %999 = vmatmul.bf16.gmra.mxu0 %v986
        %v1000 = vpop.f32.mrf.mxu0
        %v1001 = vadd.f32 0.0, %v1000
        %v1002 = vpop.f32.mrf.mxu0
        %1003 = vdwg.mxu0
        %v1004 = vpack.c.bf16 %v1001, %v1001
        %v1007 = vunpack.c.l.b16 %v828
        %v1008 = vunpack.c.l.b16 %v829
        %v1009 = vpack.c.b16 %v1008, %v1007
        %v1012 = vsel %vm473, %v1004, 0
        %1014 = vmatpush.bf16.msra.mxu0 0
        %1015 = vmatpush.bf16.msra.mxu0 0
        %1016 = vmatpush.bf16.msra.mxu0 0
        %1017 = vmatpush.bf16.msra.mxu0 0
        %1018 = vmatpush.bf16.msra.mxu0 0
        %1019 = vmatpush.bf16.msra.mxu0 0
        %1020 = vmatpush.bf16.msra.mxu0 0
        %1021 = vmatpush.bf16.msra.mxu0 %v1009
        %1022 = vmatmul.bf16.gmra.mxu0 %v1012
        %v1023 = vpop.f32.mrf.mxu0
        %v1024 = vadd.f32 0.0, %v1023
        %v1025 = vpop.f32.mrf.mxu0
        %1026 = vdwg.mxu0
        %v1029 = vunpack.c.l.b16 %v826
        %v1030 = vunpack.c.l.b16 %v827
        %v1031 = vpack.c.b16 %v1030, %v1029
        %v1034 = vsel %vm473, %v932, 0
        %1036 = vmatpush.bf16.msra.mxu0 0
        %1037 = vmatpush.bf16.msra.mxu0 0
        %1038 = vmatpush.bf16.msra.mxu0 0
        %1039 = vmatpush.bf16.msra.mxu0 0
        %1040 = vmatpush.bf16.msra.mxu0 0
        %1041 = vmatpush.bf16.msra.mxu0 0
        %1042 = vmatpush.bf16.msra.mxu0 0
        %1043 = vmatpush.bf16.msra.mxu0 %v1031
        %1044 = vmatmul.bf16.gmra.mxu0 %v1034
        %v1045 = vpop.f32.mrf.mxu0
        %v1046 = vadd.f32 %v1024, %v1045
        %v1047 = vpop.f32.mrf.mxu0
        %1048 = vdwg.mxu0
        %v1049 = vld [vmem:[#allocation8 + $0xb] sm:$0x1]
        %v1050 = vperm.slane %v1049, 0
        %v1051 = vadd.f32 %v1046, %v1050
        %v1052 = vadd.f32 %v1051, %v819
        %v1053 = vld [vmem:[#allocation8 + $0xc] sm:$0x1]
        %v1054 = vld [vmem:[#allocation8 + $0xd] sm:$0x1]
        %v1055 = vsel %vm395, %v1052, 0.0
        %1056 = vadd.xlane.f32.xlu0 %v1055
        %v1057 = vpop.xlane.xlu0 %1056
        %v1058 = vmul.f32 %v1057, %v405
        %v1059 = vsub.f32 %v1052, %v1058
        %v1060 = vmul.f32 %v1059, %v1059
        %v1061 = vsel %vm395, %v1060, 0.0
        %1062 = vadd.xlane.f32.xlu0 %v1061
        %v1063 = vpop.xlane.xlu0 %1062
        %v1064 = vmul.f32 %v1063, %v405
        %v1065 = vadd.f32 %v1064, 1e-12
        %v1066 = vrsqrt.pop %v1065
        %v1067 = vmul.f32 %v1066, %v1065
        %v1068 = vmul.f32 %v1067, %v1066
        %v1069 = vmul.f32 0.5, %v1068
        %v1070 = vsub.f32 1.5, %v1069
        %v1071 = vmul.f32 %v1066, %v1070
        %vm1072 = vweird.f32 %v1065
        %vm1073 = vweird.f32 %v1066
        %vm1074 = vmor %vm1072, %vm1073
        %v1075 = vsel %vm1074, %v1066, %v1071
        %v1076 = vmul.f32 %v1059, %v1075
        %v1077 = vperm.slane %v1053, 0
        %v1078 = vmul.f32 %v1076, %v1077
        %v1079 = vperm.slane %v1054, 0
        %v1080 = vadd.f32 %v1078, %v1079
        %v1081 = vpack.c.bf16 %v1080, %v1080
        %s1082 = scalar_lea.vmem %s4, 16
        %v1083 = vld [vmem:[%s1082] sm:$0xf]
        %v1084 = vld [vmem:[%s1082 + $0x4] sm:$0xf]
        %v1085 = vld [vmem:[%s1082 + $0x8] sm:$0xf]
        %v1086 = vld [vmem:[%s1082 + $0xc] sm:$0xf]
        %v1087 = vld [vmem:[#allocation8 + $0xe] sm:$0x1]
        %v1088 = vperm.slane %v1087, 0
        %v1093 = vunpack.c.l.b16 %v1083
        %v1094 = vunpack.c.l.b16 %v1084
        %v1095 = vunpack.c.l.b16 %v1085
        %v1096 = vunpack.c.l.b16 %v1086
        %v1097 = vpack.c.b16 %v1094, %v1093
        %v1098 = vpack.c.b16 %v1096, %v1095
        %v1102 = vsel %vm395, %v1081, 0
        %1104 = vmatpush.bf16.msra.mxu0 0
        %1105 = vmatpush.bf16.msra.mxu0 0
        %1106 = vmatpush.bf16.msra.mxu0 0
        %1107 = vmatpush.bf16.msra.mxu0 0
        %1108 = vmatpush.bf16.msra.mxu0 0
        %1109 = vmatpush.bf16.msra.mxu0 0
        %1110 = vmatpush.bf16.msra.mxu0 %v1098
        %1111 = vmatpush.bf16.msra.mxu0 %v1097
        %1112 = vmatmul.bf16.gmra.mxu0 %v1102
        %v1113 = vpop.f32.mrf.mxu0
        %v1114 = vadd.f32 %v1088, %v1113
        %v1115 = vpop.f32.mrf.mxu0
        %1116 = vdwg.mxu0
        %v1117 = vmul.f32 %v1114, %v1114
        %v1118 = vmul.f32 %v1114, %v1117
        %v1119 = vmul.f32 %v1118, 0.044715
        %v1120 = vadd.f32 %v1114, %v1119
        %v1121 = vmul.f32 %v1120, 0.7978846
        %v1122 = vtanh.pop %v1121
        %v1123 = vadd.f32 %v1122, 1.0
        %v1124 = vmul.f32 %v1123, 0.5
        %v1125 = vmul.f32 %v1114, %v1124
        %v1126 = vpack.c.bf16 %v1125, %v1125
        %s1127 = scalar_lea.vmem %s5, 32
        %v1128 = vld [vmem:[%s1127] sm:$0xf]
        %v1129 = vld [vmem:[%s1127 + $0x4] sm:$0xf]
        %v1130 = vld [vmem:[%s1127 + $0x8] sm:$0xf]
        %v1131 = vld [vmem:[%s1127 + $0xc] sm:$0xf]
        %v1132 = vld [vmem:[%s1127 + $0x10] sm:$0xf]
        %v1133 = vld [vmem:[%s1127 + $0x14] sm:$0xf]
        %v1134 = vld [vmem:[%s1127 + $0x18] sm:$0xf]
        %v1135 = vld [vmem:[%s1127 + $0x1c] sm:$0xf]
        %v1136 = vld [vmem:[#allocation8 + $0xf] sm:$0x1]
        %v1137 = vperm.slane %v1136, 0
        %v1146 = vunpack.c.l.b16 %v1128
        %v1147 = vunpack.c.l.b16 %v1129
        %v1148 = vunpack.c.l.b16 %v1130
        %v1149 = vunpack.c.l.b16 %v1131
        %v1150 = vunpack.c.l.b16 %v1132
        %v1151 = vunpack.c.l.b16 %v1133
        %v1152 = vunpack.c.l.b16 %v1134
        %v1153 = vunpack.c.l.b16 %v1135
        %v1154 = vpack.c.b16 %v1147, %v1146
        %v1155 = vpack.c.b16 %v1149, %v1148
        %v1156 = vpack.c.b16 %v1151, %v1150
        %v1157 = vpack.c.b16 %v1153, %v1152
        %v1163 = vsel %vm774, %v1126, 0
        %1165 = vmatpush.bf16.msra.mxu0 0
        %1166 = vmatpush.bf16.msra.mxu0 0
        %1167 = vmatpush.bf16.msra.mxu0 0
        %1168 = vmatpush.bf16.msra.mxu0 0
        %1169 = vmatpush.bf16.msra.mxu0 %v1157
        %1170 = vmatpush.bf16.msra.mxu0 %v1156
        %1171 = vmatpush.bf16.msra.mxu0 %v1155
        %1172 = vmatpush.bf16.msra.mxu0 %v1154
        %1173 = vmatmul.bf16.gmra.mxu0 %v1163
        %v1174 = vpop.f32.mrf.mxu0
        %v1175 = vadd.f32 %v1137, %v1174
        %v1176 = vpop.f32.mrf.mxu0
        %1177 = vdwg.mxu0
        %v1178 = vadd.f32 %v1175, %v1080
        %v1179 = vld [vmem:[#allocation8 + $0x10] sm:$0x1]
        %v1180 = vld [vmem:[#allocation8 + $0x11] sm:$0x1]
        %v1181 = vsel %vm395, %v1178, 0.0
        %1182 = vadd.xlane.f32.xlu0 %v1181
        %v1183 = vpop.xlane.xlu0 %1182
        %v1184 = vmul.f32 %v1183, %v405
        %v1185 = vsub.f32 %v1178, %v1184
        %v1186 = vmul.f32 %v1185, %v1185
        %v1187 = vsel %vm395, %v1186, 0.0
        %1188 = vadd.xlane.f32.xlu0 %v1187
        %v1189 = vpop.xlane.xlu0 %1188
        %v1190 = vmul.f32 %v1189, %v405
        %v1191 = vadd.f32 %v1190, 1e-12
        %v1192 = vrsqrt.pop %v1191
        %v1193 = vmul.f32 %v1192, %v1191
        %v1194 = vmul.f32 %v1193, %v1192
        %v1195 = vmul.f32 0.5, %v1194
        %v1196 = vsub.f32 1.5, %v1195
        %v1197 = vmul.f32 %v1192, %v1196
        %vm1198 = vweird.f32 %v1191
        %vm1199 = vweird.f32 %v1192
        %vm1200 = vmor %vm1198, %vm1199
        %v1201 = vsel %vm1200, %v1192, %v1197
        %v1202 = vmul.f32 %v1185, %v1201
        %v1203 = vperm.slane %v1179, 0
        %v1204 = vmul.f32 %v1202, %v1203
        %v1205 = vperm.slane %v1180, 0
        %v1206 = vadd.f32 %v1204, %v1205
        %v1207 = vpack.c.bf16 %v1206, %v1206
        %v1208 = vld [vmem:[#allocation7] sm:$0xf]
        %v1209 = vld [vmem:[#allocation7 + $0x4] sm:$0xf]
        %v1210 = vld [vmem:[#allocation7 + $0x8] sm:$0xf]
        %v1211 = vld [vmem:[#allocation7 + $0xc] sm:$0xf]
        %v1212 = vld [vmem:[#allocation8 + $0x12] sm:$0x1]
        %v1213 = vperm.slane %v1212, 0
        %v1218 = vunpack.c.l.b16 %v1208
        %v1219 = vunpack.c.l.b16 %v1209
        %v1220 = vunpack.c.l.b16 %v1210
        %v1221 = vunpack.c.l.b16 %v1211
        %v1222 = vpack.c.b16 %v1219, %v1218
        %v1223 = vpack.c.b16 %v1221, %v1220
        %v1227 = vsel %vm395, %v1207, 0
        %1229 = vmatpush.bf16.msra.mxu0 0
        %1230 = vmatpush.bf16.msra.mxu0 0
        %1231 = vmatpush.bf16.msra.mxu0 0
        %1232 = vmatpush.bf16.msra.mxu0 0
        %1233 = vmatpush.bf16.msra.mxu0 0
        %1234 = vmatpush.bf16.msra.mxu0 0
        %1235 = vmatpush.bf16.msra.mxu0 %v1223
        %1236 = vmatpush.bf16.msra.mxu0 %v1222
        %1237 = vmatmul.bf16.gmra.mxu0 %v1227
        %v1238 = vpop.f32.mrf.mxu0
        %v1239 = vadd.f32 %v1213, %v1238
        %v1240 = vpop.f32.mrf.mxu0
        %1241 = vdwg.mxu0
        %1242 = vmax.xlane.f32.xlu0 %v1239
        %v1243 = vpop.xlane.xlu0 %1242
        %v1244 = vsub.f32 %v1239, %v1243
        %v1245 = vmul.f32 %v1244, 1.442695
        %v1246 = vpow.pop %v1245
        %1247 = vadd.xlane.f32.xlu0 %v1246
        %v1248 = vpop.xlane.xlu0 %1247
        %v1249 = vrcp.pop %v1248
        %v1250 = vmul.f32 %v1248, %v1249
        %v1251 = vsub.f32 1.0, %v1250
        %v1252 = vmul.f32 %v1249, %v1251
        %v1253 = vadd.f32 %v1249, %v1252
        %vm1254 = vweird.f32 %v1248
        %vm1255 = vweird.f32 %v1249
        %vm1256 = vmor %vm1254, %vm1255
        %v1257 = vsel %vm1256, %v1249, %v1253
        %v1258 = vand.u32 2147483647, %v1248
        %vm1259 = vcmp.eq.f32.partialorder %v1258, 8.507059e+37
        %v1260 = vand.u32 %v1248, 2147483648
        %v1261 = vor.u32 1.1754944e-38, %v1260
        %v1262 = vsel %vm1259, %v1261, %v1257
        %v1263 = vmul.f32 %v1246, %v1262
        %1264 = vst [vmem:[%s390] sm:$0xff] %v1263
        %s1265 = sand.u32 %s215, 1
        %s1266 = scalar_lea.sflag [#allocation4], %s1265
        %s1267 = sand.u32 %s215, 1
        %s1268 = smul.addr %s1267, 8
        %s1269 = scalar_lea.vmem [#allocation10], %s1268
        // Predicated region
        $region69: #{tpu_custom_call.1} parent=51 // pred_check
          %p1270 = pneg %p225
        $region70: #{tpu_custom_call.1} parent=51 // pred_check_branch
          %1272 = sbr.rel (%p1270) target = $region72
        $region71: #{tpu_custom_call.1} parent=51 // pred_region
          %1274 = vsyncadd %s1266, 0
          %s1275 = smul.addr %s29, 8
          %s1276 = scalar_lea.hbm %s8, %s1275
          %s1278 = sshll.u32 %s1269, 4
          %s1279 = int_to_ptr.vmem [resolvable:$true] %s1278
          %s1280 = sshll.u32 %s1276, 4
          %s1281 = int_to_ptr.hbm [resolvable:$true] %s1280
          %1283 = dma.vmem_to_hbm [thread:$0]  %s1279, 128, %s1281, %s1266
        $region72: #{tpu_custom_call.1} parent=51 // pred_fallthru
          _
      $region52: #{tpu_custom_call.1} parent=5 // pred_fallthru
        _
      %p1284 = scmp.le.s32.totalorder 2, %s24
      // Predicated region
      $region73: #{tpu_custom_call.1} parent=5 // pred_check
        %p1285 = pneg %p1284
      $region74: #{tpu_custom_call.1} parent=5 // pred_check_branch
        %1287 = sbr.rel (%p1285) target = $region76
      $region75: #{tpu_custom_call.1} parent=5 // pred_region
        %s1288 = ssub.s32 %s24, 2
        // Predicated region
        $region77: #{tpu_custom_call.1} parent=75 // pred_check
          %p1289 = pneg %p231
        $region78: #{tpu_custom_call.1} parent=75 // pred_check_branch
          %1291 = sbr.rel (%p1289) target = $region80
        $region79: #{tpu_custom_call.1} parent=75 // pred_region
          %s1292 = sand.u32 %s216, 1
          %s1293 = scalar_lea.sflag [#allocation4], %s1292
          %s1294 = sand.u32 %s216, 1
          %s1295 = smul.addr %s1294, 8
          %s1296 = scalar_lea.vmem [#allocation10], %s1295
          %1298 = dma.done %s1293, 128
        $region80: #{tpu_custom_call.1} parent=75 // pred_fallthru
          _
      $region76: #{tpu_custom_call.1} parent=5 // pred_fallthru
        _
    $region6: #{tpu_custom_call.1} parent=1 // loop_footer
      %s28 = sadd.s32 1, %s24
    $region7: #{tpu_custom_call.1} parent=1 // loop_footer_branch
      %23 = sbr.rel target = $region3
    $region8: #{tpu_custom_call.1} parent=1 // loop_exit
      _
    %1299 = vsyncpa [#allocation3], 1
    %s1300 = scalar_lea.sflag [#allocation3], 1
    %1301 = vsyncpa %s1300, 1
    %1302 = vsyncpa [#allocation6], 1
    %s1303 = scalar_lea.sflag [#allocation6], 1
    %1304 = vsyncpa %s1303, 1
    %1305 = vsyncpa [#allocation9], 1
    %1306 = vsyncpa [#allocation4], 1
    %s1307 = scalar_lea.sflag [#allocation4], 1
    %1308 = vsyncpa %s1307, 1

</llo_original>
